<compile_context>
chip_gen: v7x
topology: tpu7x:2x2x1
jax: 0.10.0
libtpu: 0.0.40
codegen_flags: <defaults>
</compile_context>

<pallas_src>
import functools
import math

import jax
import jax.numpy as jnp
import numpy as np
from jax.experimental import pallas as pl
from jax.experimental.pallas import tpu as pltpu


# ----------------------------------------------------------------------------
# Pallas kernel: scores + batched top-k + fused one-hot gather, one step.
# ----------------------------------------------------------------------------
def _token_selection_kernel(x_ref, w_ref, o_ref, *, top_k):
    x = x_ref[...]                                        # (B, L, E) float32
    B, L, E = x.shape
    w = w_ref[...]                                        # (1, E) Linear weight row

    # scores[b, l] = <x[b, l, :], w>  — VPU multiply + lane reduce.
    # (Bias omitted: a shared additive constant cannot change the selection.)
    scores = jnp.sum(x * w.reshape(1, 1, E), axis=-1)     # (B, L)

    neg = jnp.finfo(jnp.float32).min
    lane_iota = jax.lax.broadcasted_iota(jnp.int32, (B, L), 1)       # (B, L)
    col_iota = jax.lax.broadcasted_iota(jnp.int32, (B, top_k), 1)    # (B, k)

    # Batched iterative top-k over the whole (B, L) tile; static unroll.
    s = scores
    idx_all = jnp.zeros((B, top_k), jnp.int32)
    for j in range(top_k):
        m = jnp.max(s, axis=-1, keepdims=True)                       # (B, 1)
        cand = jnp.where(s == m, lane_iota, jnp.int32(L))            # (B, L)
        idx = jnp.min(cand, axis=-1, keepdims=True)                  # first argmax
        idx_all = jnp.where(col_iota == j, idx, idx_all)             # record idx j
        s = jnp.where(lane_iota == idx, neg, s)                      # remove winner

    # Global column index into the flattened (B*L) token axis.
    gidx = idx_all + jax.lax.broadcasted_iota(jnp.int32, (B, top_k), 0) * L

    # Block-diagonal one-hot selection matrix, built with ONE broadcast compare.
    cols = jax.lax.broadcasted_iota(jnp.int32, (B, top_k, B * L), 2)
    sel = (cols == gidx[:, :, None]).astype(jnp.float32)             # (B, k, B*L)
    sel = sel.reshape(B * top_k, B * L)                               # (B*k, B*L)

    # Single MXU issue: (B*k, B*L) @ (B*L, E).  HIGHEST precision keeps the
    # one-hot copy exact through the multi-pass bf16 f32 emulation.
    gathered = jnp.dot(sel, x.reshape(B * L, E),
                       precision=jax.lax.Precision.HIGHEST,
                       preferred_element_type=jnp.float32)            # (B*k, E)

    o_ref[...] = gathered.reshape(B, top_k, E).astype(o_ref.dtype)


def token_selection(x, weight, bias, top_k):
    """x: (b, t, n, e); weight: (1, e) torch-Linear layout; bias: (1, 1)."""
    b, t, n, e = x.shape
    L = t * n
    x_flat = x.reshape(b, L, e)                                       # free reshape

    # Bias is accepted for parameter fidelity but not forwarded: a shared
    # additive bias cannot change which tokens win the top-k.
    del bias

    kernel = functools.partial(_token_selection_kernel, top_k=top_k)
    return pl.pallas_call(
        kernel,
        out_shape=jax.ShapeDtypeStruct((b, top_k, e), x.dtype),
        grid=(1,),
        in_specs=[pl.BlockSpec((b, L, e), lambda i: (0, 0, 0)),
                  pl.BlockSpec((1, e), lambda i: (0, 0))],
        out_specs=pl.BlockSpec((b, top_k, e), lambda i: (0, 0, 0)),
        compiler_params=pltpu.CompilerParams(
            dimension_semantics=("arbitrary",)),
    )(x_flat, weight)


# ----------------------------------------------------------------------------
# Pure-JAX reference (correctness check only).
# ----------------------------------------------------------------------------
def _ref_token_selection(x, weight, bias, top_k):
    b, t, n, e = x.shape
    # Elementwise scoring (mirrors the kernel's f32 VPU path, avoids any
    # default-precision bf16 dot in the reference).
    scores = jnp.sum(x * weight[0].reshape(1, 1, 1, e), axis=-1) + bias[0, 0]
    scores = scores.reshape(b, t * n)
    _, idx = jax.lax.top_k(scores, top_k)                             # (b, top_k)
    x_flat = x.reshape(b, t * n, e)
    return jnp.take_along_axis(x_flat, idx[..., None], axis=1)        # (b, k, e)


if __name__ == "__main__":
    b, t, n, e = 2, 8, 16, 32
    top_k = 8

    key = jax.random.PRNGKey(0)
    kx, kw = jax.random.split(key)
    x = jax.random.normal(kx, (b, t, n, e), dtype=jnp.float32)

    # nn.Linear(e, 1): weight (1, e) uniform(-1/sqrt(e), 1/sqrt(e)); bias is
    # zeroed by TokenSelection.init_weights().
    bound = 1.0 / math.sqrt(e)
    weight = jax.random.uniform(kw, (1, e), jnp.float32, -bound, bound)
    bias = jnp.zeros((1, 1), jnp.float32)

    out = token_selection(x, weight, bias, top_k)
    out = jax.block_until_ready(out)
    assert out.shape == (b, top_k, e)

    ref = jax.block_until_ready(_ref_token_selection(x, weight, bias, top_k))
    np.testing.assert_allclose(np.asarray(out), np.asarray(ref),
                               rtol=1e-6, atol=1e-6)

    print("KERNEL_OK")
</pallas_src>

<mosaic_0001>
module attributes {stable_mosaic.version = 11 : i64} {
  func.func @_token_selection_kernel(%arg0: i32, %arg1: memref<2x128x32xf32, #tpu.memory_space<vmem>>, %arg2: memref<1x32xf32, #tpu.memory_space<vmem>>, %arg3: memref<2x8x32xf32, #tpu.memory_space<vmem>>) attributes {dimension_semantics = [#tpu.dimension_semantics<arbitrary>], iteration_bounds = array<i64: 1>, scalar_prefetch = 0 : i64, scratch_operands = 0 : i64, tpu.core_type = #tpu.core_type<tc>, window_params = [{pipeline_mode = #tpu.pipeline_mode<synchronous>, transform_indices = @transform_0, window_bounds = array<i64: 2, 128, 32>}, {pipeline_mode = #tpu.pipeline_mode<synchronous>, transform_indices = @transform_1, window_bounds = array<i64: 1, 32>}, {pipeline_mode = #tpu.pipeline_mode<synchronous>, transform_indices = @transform_2, window_bounds = array<i64: 2, 8, 32>}]} {
    %c0 = arith.constant 0 : index
    %c0_0 = arith.constant 0 : index
    %c0_1 = arith.constant 0 : index
    %0 = vector.load %arg1[%c0, %c0_0, %c0_1] : memref<2x128x32xf32, #tpu.memory_space<vmem>>, vector<2x128x32xf32>
    %c0_2 = arith.constant 0 : index
    %c0_3 = arith.constant 0 : index
    %1 = vector.load %arg2[%c0_2, %c0_3] : memref<1x32xf32, #tpu.memory_space<vmem>>, vector<1x32xf32>
    %2 = vector.shape_cast %1 : vector<1x32xf32> to vector<1x1x32xf32>
    %3 = vector.broadcast %2 : vector<1x1x32xf32> to vector<2x128x32xf32>
    %4 = arith.mulf %0, %3 : vector<2x128x32xf32>
    %cst = arith.constant dense<0.000000e+00> : vector<2x128xf32>
    %5 = vector.multi_reduction <add>, %4, %cst [2] : vector<2x128x32xf32> to vector<2x128xf32>
    %6 = tpu.iota {dimensions = array<i32: 1>} : vector<2x128xi32>
    %7 = tpu.iota {dimensions = array<i32: 1>} : vector<2x8xi32>
    %c0_i32 = arith.constant 0 : i32
    %8 = vector.broadcast %c0_i32 : i32 to vector<2x8xi32>
    %cst_4 = arith.constant dense<0xFF800000> : vector<2xf32>
    %9 = vector.multi_reduction <maximumf>, %5, %cst_4 [1] : vector<2x128xf32> to vector<2xf32>
    %10 = vector.shape_cast %9 : vector<2xf32> to vector<2x1xf32>
    %11 = vector.broadcast %10 : vector<2x1xf32> to vector<2x128xf32>
    %12 = arith.cmpf oeq, %5, %11 : vector<2x128xf32>
    %c128_i32 = arith.constant 128 : i32
    %13 = vector.broadcast %c128_i32 : i32 to vector<2x128xi32>
    %14 = arith.select %12, %6, %13 : vector<2x128xi1>, vector<2x128xi32>
    %cst_5 = arith.constant dense<2147483647> : vector<2xi32>
    %15 = vector.multi_reduction <minsi>, %14, %cst_5 [1] : vector<2x128xi32> to vector<2xi32>
    %16 = vector.shape_cast %15 : vector<2xi32> to vector<2x1xi32>
    %c0_i32_6 = arith.constant 0 : i32
    %17 = vector.broadcast %c0_i32_6 : i32 to vector<2x8xi32>
    %18 = arith.cmpi eq, %7, %17 : vector<2x8xi32>
    %19 = vector.shape_cast %16 : vector<2x1xi32> to vector<2x1xi32>
    %20 = vector.broadcast %19 : vector<2x1xi32> to vector<2x8xi32>
    %21 = arith.select %18, %20, %8 : vector<2x8xi1>, vector<2x8xi32>
    %22 = vector.broadcast %16 : vector<2x1xi32> to vector<2x128xi32>
    %23 = arith.cmpi eq, %6, %22 : vector<2x128xi32>
    %cst_7 = arith.constant -3.40282347E+38 : f32
    %24 = vector.broadcast %cst_7 : f32 to vector<2x128xf32>
    %25 = arith.select %23, %24, %5 : vector<2x128xi1>, vector<2x128xf32>
    %cst_8 = arith.constant dense<0xFF800000> : vector<2xf32>
    %26 = vector.multi_reduction <maximumf>, %25, %cst_8 [1] : vector<2x128xf32> to vector<2xf32>
    %27 = vector.shape_cast %26 : vector<2xf32> to vector<2x1xf32>
    %28 = vector.broadcast %27 : vector<2x1xf32> to vector<2x128xf32>
    %29 = arith.cmpf oeq, %25, %28 : vector<2x128xf32>
    %c128_i32_9 = arith.constant 128 : i32
    %30 = vector.broadcast %c128_i32_9 : i32 to vector<2x128xi32>
    %31 = arith.select %29, %6, %30 : vector<2x128xi1>, vector<2x128xi32>
    %cst_10 = arith.constant dense<2147483647> : vector<2xi32>
    %32 = vector.multi_reduction <minsi>, %31, %cst_10 [1] : vector<2x128xi32> to vector<2xi32>
    %33 = vector.shape_cast %32 : vector<2xi32> to vector<2x1xi32>
    %c1_i32 = arith.constant 1 : i32
    %34 = vector.broadcast %c1_i32 : i32 to vector<2x8xi32>
    %35 = arith.cmpi eq, %7, %34 : vector<2x8xi32>
    %36 = vector.shape_cast %33 : vector<2x1xi32> to vector<2x1xi32>
    %37 = vector.broadcast %36 : vector<2x1xi32> to vector<2x8xi32>
    %38 = arith.select %35, %37, %21 : vector<2x8xi1>, vector<2x8xi32>
    %39 = vector.broadcast %33 : vector<2x1xi32> to vector<2x128xi32>
    %40 = arith.cmpi eq, %6, %39 : vector<2x128xi32>
    %cst_11 = arith.constant -3.40282347E+38 : f32
    %41 = vector.broadcast %cst_11 : f32 to vector<2x128xf32>
    %42 = arith.select %40, %41, %25 : vector<2x128xi1>, vector<2x128xf32>
    %cst_12 = arith.constant dense<0xFF800000> : vector<2xf32>
    %43 = vector.multi_reduction <maximumf>, %42, %cst_12 [1] : vector<2x128xf32> to vector<2xf32>
    %44 = vector.shape_cast %43 : vector<2xf32> to vector<2x1xf32>
    %45 = vector.broadcast %44 : vector<2x1xf32> to vector<2x128xf32>
    %46 = arith.cmpf oeq, %42, %45 : vector<2x128xf32>
    %c128_i32_13 = arith.constant 128 : i32
    %47 = vector.broadcast %c128_i32_13 : i32 to vector<2x128xi32>
    %48 = arith.select %46, %6, %47 : vector<2x128xi1>, vector<2x128xi32>
    %cst_14 = arith.constant dense<2147483647> : vector<2xi32>
    %49 = vector.multi_reduction <minsi>, %48, %cst_14 [1] : vector<2x128xi32> to vector<2xi32>
    %50 = vector.shape_cast %49 : vector<2xi32> to vector<2x1xi32>
    %c2_i32 = arith.constant 2 : i32
    %51 = vector.broadcast %c2_i32 : i32 to vector<2x8xi32>
    %52 = arith.cmpi eq, %7, %51 : vector<2x8xi32>
    %53 = vector.shape_cast %50 : vector<2x1xi32> to vector<2x1xi32>
    %54 = vector.broadcast %53 : vector<2x1xi32> to vector<2x8xi32>
    %55 = arith.select %52, %54, %38 : vector<2x8xi1>, vector<2x8xi32>
    %56 = vector.broadcast %50 : vector<2x1xi32> to vector<2x128xi32>
    %57 = arith.cmpi eq, %6, %56 : vector<2x128xi32>
    %cst_15 = arith.constant -3.40282347E+38 : f32
    %58 = vector.broadcast %cst_15 : f32 to vector<2x128xf32>
    %59 = arith.select %57, %58, %42 : vector<2x128xi1>, vector<2x128xf32>
    %cst_16 = arith.constant dense<0xFF800000> : vector<2xf32>
    %60 = vector.multi_reduction <maximumf>, %59, %cst_16 [1] : vector<2x128xf32> to vector<2xf32>
    %61 = vector.shape_cast %60 : vector<2xf32> to vector<2x1xf32>
    %62 = vector.broadcast %61 : vector<2x1xf32> to vector<2x128xf32>
    %63 = arith.cmpf oeq, %59, %62 : vector<2x128xf32>
    %c128_i32_17 = arith.constant 128 : i32
    %64 = vector.broadcast %c128_i32_17 : i32 to vector<2x128xi32>
    %65 = arith.select %63, %6, %64 : vector<2x128xi1>, vector<2x128xi32>
    %cst_18 = arith.constant dense<2147483647> : vector<2xi32>
    %66 = vector.multi_reduction <minsi>, %65, %cst_18 [1] : vector<2x128xi32> to vector<2xi32>
    %67 = vector.shape_cast %66 : vector<2xi32> to vector<2x1xi32>
    %c3_i32 = arith.constant 3 : i32
    %68 = vector.broadcast %c3_i32 : i32 to vector<2x8xi32>
    %69 = arith.cmpi eq, %7, %68 : vector<2x8xi32>
    %70 = vector.shape_cast %67 : vector<2x1xi32> to vector<2x1xi32>
    %71 = vector.broadcast %70 : vector<2x1xi32> to vector<2x8xi32>
    %72 = arith.select %69, %71, %55 : vector<2x8xi1>, vector<2x8xi32>
    %73 = vector.broadcast %67 : vector<2x1xi32> to vector<2x128xi32>
    %74 = arith.cmpi eq, %6, %73 : vector<2x128xi32>
    %cst_19 = arith.constant -3.40282347E+38 : f32
    %75 = vector.broadcast %cst_19 : f32 to vector<2x128xf32>
    %76 = arith.select %74, %75, %59 : vector<2x128xi1>, vector<2x128xf32>
    %cst_20 = arith.constant dense<0xFF800000> : vector<2xf32>
    %77 = vector.multi_reduction <maximumf>, %76, %cst_20 [1] : vector<2x128xf32> to vector<2xf32>
    %78 = vector.shape_cast %77 : vector<2xf32> to vector<2x1xf32>
    %79 = vector.broadcast %78 : vector<2x1xf32> to vector<2x128xf32>
    %80 = arith.cmpf oeq, %76, %79 : vector<2x128xf32>
    %c128_i32_21 = arith.constant 128 : i32
    %81 = vector.broadcast %c128_i32_21 : i32 to vector<2x128xi32>
    %82 = arith.select %80, %6, %81 : vector<2x128xi1>, vector<2x128xi32>
    %cst_22 = arith.constant dense<2147483647> : vector<2xi32>
    %83 = vector.multi_reduction <minsi>, %82, %cst_22 [1] : vector<2x128xi32> to vector<2xi32>
    %84 = vector.shape_cast %83 : vector<2xi32> to vector<2x1xi32>
    %c4_i32 = arith.constant 4 : i32
    %85 = vector.broadcast %c4_i32 : i32 to vector<2x8xi32>
    %86 = arith.cmpi eq, %7, %85 : vector<2x8xi32>
    %87 = vector.shape_cast %84 : vector<2x1xi32> to vector<2x1xi32>
    %88 = vector.broadcast %87 : vector<2x1xi32> to vector<2x8xi32>
    %89 = arith.select %86, %88, %72 : vector<2x8xi1>, vector<2x8xi32>
    %90 = vector.broadcast %84 : vector<2x1xi32> to vector<2x128xi32>
    %91 = arith.cmpi eq, %6, %90 : vector<2x128xi32>
    %cst_23 = arith.constant -3.40282347E+38 : f32
    %92 = vector.broadcast %cst_23 : f32 to vector<2x128xf32>
    %93 = arith.select %91, %92, %76 : vector<2x128xi1>, vector<2x128xf32>
    %cst_24 = arith.constant dense<0xFF800000> : vector<2xf32>
    %94 = vector.multi_reduction <maximumf>, %93, %cst_24 [1] : vector<2x128xf32> to vector<2xf32>
    %95 = vector.shape_cast %94 : vector<2xf32> to vector<2x1xf32>
    %96 = vector.broadcast %95 : vector<2x1xf32> to vector<2x128xf32>
    %97 = arith.cmpf oeq, %93, %96 : vector<2x128xf32>
    %c128_i32_25 = arith.constant 128 : i32
    %98 = vector.broadcast %c128_i32_25 : i32 to vector<2x128xi32>
    %99 = arith.select %97, %6, %98 : vector<2x128xi1>, vector<2x128xi32>
    %cst_26 = arith.constant dense<2147483647> : vector<2xi32>
    %100 = vector.multi_reduction <minsi>, %99, %cst_26 [1] : vector<2x128xi32> to vector<2xi32>
    %101 = vector.shape_cast %100 : vector<2xi32> to vector<2x1xi32>
    %c5_i32 = arith.constant 5 : i32
    %102 = vector.broadcast %c5_i32 : i32 to vector<2x8xi32>
    %103 = arith.cmpi eq, %7, %102 : vector<2x8xi32>
    %104 = vector.shape_cast %101 : vector<2x1xi32> to vector<2x1xi32>
    %105 = vector.broadcast %104 : vector<2x1xi32> to vector<2x8xi32>
    %106 = arith.select %103, %105, %89 : vector<2x8xi1>, vector<2x8xi32>
    %107 = vector.broadcast %101 : vector<2x1xi32> to vector<2x128xi32>
    %108 = arith.cmpi eq, %6, %107 : vector<2x128xi32>
    %cst_27 = arith.constant -3.40282347E+38 : f32
    %109 = vector.broadcast %cst_27 : f32 to vector<2x128xf32>
    %110 = arith.select %108, %109, %93 : vector<2x128xi1>, vector<2x128xf32>
    %cst_28 = arith.constant dense<0xFF800000> : vector<2xf32>
    %111 = vector.multi_reduction <maximumf>, %110, %cst_28 [1] : vector<2x128xf32> to vector<2xf32>
    %112 = vector.shape_cast %111 : vector<2xf32> to vector<2x1xf32>
    %113 = vector.broadcast %112 : vector<2x1xf32> to vector<2x128xf32>
    %114 = arith.cmpf oeq, %110, %113 : vector<2x128xf32>
    %c128_i32_29 = arith.constant 128 : i32
    %115 = vector.broadcast %c128_i32_29 : i32 to vector<2x128xi32>
    %116 = arith.select %114, %6, %115 : vector<2x128xi1>, vector<2x128xi32>
    %cst_30 = arith.constant dense<2147483647> : vector<2xi32>
    %117 = vector.multi_reduction <minsi>, %116, %cst_30 [1] : vector<2x128xi32> to vector<2xi32>
    %118 = vector.shape_cast %117 : vector<2xi32> to vector<2x1xi32>
    %c6_i32 = arith.constant 6 : i32
    %119 = vector.broadcast %c6_i32 : i32 to vector<2x8xi32>
    %120 = arith.cmpi eq, %7, %119 : vector<2x8xi32>
    %121 = vector.shape_cast %118 : vector<2x1xi32> to vector<2x1xi32>
    %122 = vector.broadcast %121 : vector<2x1xi32> to vector<2x8xi32>
    %123 = arith.select %120, %122, %106 : vector<2x8xi1>, vector<2x8xi32>
    %124 = vector.broadcast %118 : vector<2x1xi32> to vector<2x128xi32>
    %125 = arith.cmpi eq, %6, %124 : vector<2x128xi32>
    %cst_31 = arith.constant -3.40282347E+38 : f32
    %126 = vector.broadcast %cst_31 : f32 to vector<2x128xf32>
    %127 = arith.select %125, %126, %110 : vector<2x128xi1>, vector<2x128xf32>
    %cst_32 = arith.constant dense<0xFF800000> : vector<2xf32>
    %128 = vector.multi_reduction <maximumf>, %127, %cst_32 [1] : vector<2x128xf32> to vector<2xf32>
    %129 = vector.shape_cast %128 : vector<2xf32> to vector<2x1xf32>
    %130 = vector.broadcast %129 : vector<2x1xf32> to vector<2x128xf32>
    %131 = arith.cmpf oeq, %127, %130 : vector<2x128xf32>
    %c128_i32_33 = arith.constant 128 : i32
    %132 = vector.broadcast %c128_i32_33 : i32 to vector<2x128xi32>
    %133 = arith.select %131, %6, %132 : vector<2x128xi1>, vector<2x128xi32>
    %cst_34 = arith.constant dense<2147483647> : vector<2xi32>
    %134 = vector.multi_reduction <minsi>, %133, %cst_34 [1] : vector<2x128xi32> to vector<2xi32>
    %135 = vector.shape_cast %134 : vector<2xi32> to vector<2x1xi32>
    %c7_i32 = arith.constant 7 : i32
    %136 = vector.broadcast %c7_i32 : i32 to vector<2x8xi32>
    %137 = arith.cmpi eq, %7, %136 : vector<2x8xi32>
    %138 = vector.shape_cast %135 : vector<2x1xi32> to vector<2x1xi32>
    %139 = vector.broadcast %138 : vector<2x1xi32> to vector<2x8xi32>
    %140 = arith.select %137, %139, %123 : vector<2x8xi1>, vector<2x8xi32>
    %141 = tpu.iota {dimensions = array<i32: 0>} : vector<2x8xi32>
    %c128_i32_35 = arith.constant 128 : i32
    %142 = vector.broadcast %c128_i32_35 : i32 to vector<2x8xi32>
    %143 = arith.muli %141, %142 : vector<2x8xi32>
    %144 = arith.addi %140, %143 : vector<2x8xi32>
    %145 = tpu.iota {dimensions = array<i32: 2>} : vector<2x8x256xi32>
    %146 = vector.shape_cast %144 : vector<2x8xi32> to vector<2x8x1xi32>
    %147 = vector.broadcast %146 : vector<2x8x1xi32> to vector<2x8x256xi32>
    %148 = arith.cmpi eq, %145, %147 : vector<2x8x256xi32>
    %149 = arith.extui %148 : vector<2x8x256xi1> to vector<2x8x256xi32>
    %150 = arith.sitofp %149 : vector<2x8x256xi32> to vector<2x8x256xf32>
    %151 = vector.shape_cast %150 : vector<2x8x256xf32> to vector<16x256xf32>
    %152 = vector.shape_cast %0 : vector<2x128x32xf32> to vector<256x32xf32>
    %cst_36 = arith.constant dense<0.000000e+00> : vector<16x32xf32>
    %153 = tpu.matmul %151, %152, %cst_36 {dimension_numbers = #tpu.dot_dimension_numbers<[1], [0], [0], [1], [0, 0, 1, 1], [], []>, precision = #tpu.contract_precision<fp32>} : vector<16x256xf32>, vector<256x32xf32>, vector<16x32xf32> -> vector<16x32xf32>
    %154 = vector.shape_cast %153 : vector<16x32xf32> to vector<2x8x32xf32>
    %c0_37 = arith.constant 0 : index
    %c0_38 = arith.constant 0 : index
    %c0_39 = arith.constant 0 : index
    %155 = vector.load %arg3[%c0_37, %c0_38, %c0_39] : memref<2x8x32xf32, #tpu.memory_space<vmem>>, vector<2x8x32xf32>
    tpu.vector_store %arg3[%c0_37, %c0_38, %c0_39], %154 {strides = array<i32>} : memref<2x8x32xf32, #tpu.memory_space<vmem>>, vector<2x8x32xf32>,
    return
  }
  func.func @transform_0(%arg0: i32) -> (i32, i32, i32) {
    %c0_i32 = arith.constant 0 : i32
    %c0_i32_0 = arith.constant 0 : i32
    %c0_i32_1 = arith.constant 0 : i32
    %c0_i32_2 = arith.constant 0 : i32
    return %c0_i32, %c0_i32_0, %c0_i32_1 : i32, i32, i32
  }
  func.func @transform_1(%arg0: i32) -> (i32, i32) {
    %c0_i32 = arith.constant 0 : i32
    %c0_i32_0 = arith.constant 0 : i32
    %c0_i32_1 = arith.constant 0 : i32
    return %c0_i32, %c0_i32_0 : i32, i32
  }
  func.func @transform_2(%arg0: i32) -> (i32, i32, i32) {
    %c0_i32 = arith.constant 0 : i32
    %c0_i32_0 = arith.constant 0 : i32
    %c0_i32_1 = arith.constant 0 : i32
    %c0_i32_2 = arith.constant 0 : i32
    return %c0_i32, %c0_i32_0, %c0_i32_1 : i32, i32, i32
  }
}

</mosaic_0001>

<llo_original>
// kernel: tpu_custom_call.1
$region0: #{tpu_custom_call.1}
  #allocation0 [shape = 'u32[]', space=smem, size = 0x4, offset = 0x4, fixed_abs, tag = 'smem constant byte address 0x4 - core index']
  #allocation1 [shape = 'u32[144,128]{1,0:T(1,128)}', space=vmem, size = 0x12000, scoped, tag = 'internal scratch']
  %s0 = inlined_call_operand.vmem [shape: f32[2,128,32], index: 0, kind: input, shape index: {}]
  %s1 = inlined_call_operand.vmem [shape: f32[1,32], index: 1, kind: input, shape index: {}]
  %s2 = inlined_call_operand.hbm [shape: f32[2,8,32], index: 2, kind: output, shape index: {}]
  %s3 = sld [smem:[#allocation0]]
  $region18: #{tpu_custom_call.1} parent=0
    _
  %s5 = ssub.s32 1, %s3
  %s6 = scalar_select 0, %s5, %s3
  $region1: #{tpu_custom_call.1} parent=0
    #allocation2 [shape = 'u8[8192]{0}', space=vmem, size = 0x2000, scoped, tag = 'output window, operand 0, single buffered']
    #allocation3 [shape = 's32[1]{0}', space=sflag, size = 0x4, scoped, tag = 'scoped memory for tpu_custom_call.1']
    %7 = vsyncpa [#allocation3], 0
    // Predicated region
    $region2: #{tpu_custom_call.1} parent=1 // pred_check
      _
    $region3: #{tpu_custom_call.1} parent=1 // pred_check_branch
      %9 = sbr.rel (0) target = $region5
    $region4: #{tpu_custom_call.1} parent=1 // pred_region
      _
    $region5: #{tpu_custom_call.1} parent=1 // pred_fallthru
      _
    // Predicated region
    $region6: #{tpu_custom_call.1} parent=1 // pred_check
      _
    $region7: #{tpu_custom_call.1} parent=1 // pred_check_branch
      %11 = sbr.rel (0) target = $region9
    $region8: #{tpu_custom_call.1} parent=1 // pred_region
      _
    $region9: #{tpu_custom_call.1} parent=1 // pred_fallthru
      _
    %v12 = vld [vmem:[%s0] sm:$0xff]
    %v13 = vld [vmem:[%s0 + $0x8] sm:$0xff]
    %v14 = vld [vmem:[%s0 + $0x10] sm:$0xff]
    %v15 = vld [vmem:[%s0 + $0x18] sm:$0xff]
    %v16 = vld [vmem:[%s0 + $0x20] sm:$0xff]
    %v17 = vld [vmem:[%s0 + $0x28] sm:$0xff]
    %v18 = vld [vmem:[%s0 + $0x30] sm:$0xff]
    %v19 = vld [vmem:[%s0 + $0x38] sm:$0xff]
    %v20 = vld [vmem:[%s0 + $0x40] sm:$0xff]
    %v21 = vld [vmem:[%s0 + $0x48] sm:$0xff]
    %v22 = vld [vmem:[%s0 + $0x50] sm:$0xff]
    %v23 = vld [vmem:[%s0 + $0x58] sm:$0xff]
    %v24 = vld [vmem:[%s0 + $0x60] sm:$0xff]
    %v25 = vld [vmem:[%s0 + $0x68] sm:$0xff]
    %v26 = vld [vmem:[%s0 + $0x70] sm:$0xff]
    %v27 = vld [vmem:[%s0 + $0x78] sm:$0xff]
    %v28 = vld [vmem:[%s0 + $0x80] sm:$0xff]
    %v29 = vld [vmem:[%s0 + $0x88] sm:$0xff]
    %v30 = vld [vmem:[%s0 + $0x90] sm:$0xff]
    %v31 = vld [vmem:[%s0 + $0x98] sm:$0xff]
    %v32 = vld [vmem:[%s0 + $0xa0] sm:$0xff]
    %v33 = vld [vmem:[%s0 + $0xa8] sm:$0xff]
    %v34 = vld [vmem:[%s0 + $0xb0] sm:$0xff]
    %v35 = vld [vmem:[%s0 + $0xb8] sm:$0xff]
    %v36 = vld [vmem:[%s0 + $0xc0] sm:$0xff]
    %v37 = vld [vmem:[%s0 + $0xc8] sm:$0xff]
    %v38 = vld [vmem:[%s0 + $0xd0] sm:$0xff]
    %v39 = vld [vmem:[%s0 + $0xd8] sm:$0xff]
    %v40 = vld [vmem:[%s0 + $0xe0] sm:$0xff]
    %v41 = vld [vmem:[%s0 + $0xe8] sm:$0xff]
    %v42 = vld [vmem:[%s0 + $0xf0] sm:$0xff]
    %v43 = vld [vmem:[%s0 + $0xf8] sm:$0xff]
    %v44 = vld [vmem:[%s1] sm:$0x1]
    %v46 = vlaneseq
    %v47 = vshrl.u32 %v46, 7
    %v48 = vsub.s32 0, %v47
    %v49 = vrot.slane %v44, %v48
    %v51 = vmul.f32 %v12, %v49
    %v52 = vmul.f32 %v13, %v49
    %v53 = vmul.f32 %v14, %v49
    %v54 = vmul.f32 %v15, %v49
    %v55 = vmul.f32 %v16, %v49
    %v56 = vmul.f32 %v17, %v49
    %v57 = vmul.f32 %v18, %v49
    %v58 = vmul.f32 %v19, %v49
    %v59 = vmul.f32 %v20, %v49
    %v60 = vmul.f32 %v21, %v49
    %v61 = vmul.f32 %v22, %v49
    %v62 = vmul.f32 %v23, %v49
    %v63 = vmul.f32 %v24, %v49
    %v64 = vmul.f32 %v25, %v49
    %v65 = vmul.f32 %v26, %v49
    %v66 = vmul.f32 %v27, %v49
    %v67 = vmul.f32 %v28, %v49
    %v68 = vmul.f32 %v29, %v49
    %v69 = vmul.f32 %v30, %v49
    %v70 = vmul.f32 %v31, %v49
    %v71 = vmul.f32 %v32, %v49
    %v72 = vmul.f32 %v33, %v49
    %v73 = vmul.f32 %v34, %v49
    %v74 = vmul.f32 %v35, %v49
    %v75 = vmul.f32 %v36, %v49
    %v76 = vmul.f32 %v37, %v49
    %v77 = vmul.f32 %v38, %v49
    %v78 = vmul.f32 %v39, %v49
    %v79 = vmul.f32 %v40, %v49
    %v80 = vmul.f32 %v41, %v49
    %v81 = vmul.f32 %v42, %v49
    %v82 = vmul.f32 %v43, %v49
    %vm83 = vcmask 261120
    %v84 = vsel %vm83, %v51, 0.0
    %85 = vadd.xlane.f32.xlu0 %v84
    %v86 = vpop.xlane.xlu0 %85
    %v87 = vsel %vm83, %v52, 0.0
    %88 = vadd.xlane.f32.xlu0 %v87
    %v89 = vpop.xlane.xlu0 %88
    %v90 = vsel %vm83, %v53, 0.0
    %91 = vadd.xlane.f32.xlu0 %v90
    %v92 = vpop.xlane.xlu0 %91
    %v93 = vsel %vm83, %v54, 0.0
    %94 = vadd.xlane.f32.xlu0 %v93
    %v95 = vpop.xlane.xlu0 %94
    %v96 = vsel %vm83, %v55, 0.0
    %97 = vadd.xlane.f32.xlu0 %v96
    %v98 = vpop.xlane.xlu0 %97
    %v99 = vsel %vm83, %v56, 0.0
    %100 = vadd.xlane.f32.xlu0 %v99
    %v101 = vpop.xlane.xlu0 %100
    %v102 = vsel %vm83, %v57, 0.0
    %103 = vadd.xlane.f32.xlu0 %v102
    %v104 = vpop.xlane.xlu0 %103
    %v105 = vsel %vm83, %v58, 0.0
    %106 = vadd.xlane.f32.xlu0 %v105
    %v107 = vpop.xlane.xlu0 %106
    %v108 = vsel %vm83, %v59, 0.0
    %109 = vadd.xlane.f32.xlu0 %v108
    %v110 = vpop.xlane.xlu0 %109
    %v111 = vsel %vm83, %v60, 0.0
    %112 = vadd.xlane.f32.xlu0 %v111
    %v113 = vpop.xlane.xlu0 %112
    %v114 = vsel %vm83, %v61, 0.0
    %115 = vadd.xlane.f32.xlu0 %v114
    %v116 = vpop.xlane.xlu0 %115
    %v117 = vsel %vm83, %v62, 0.0
    %118 = vadd.xlane.f32.xlu0 %v117
    %v119 = vpop.xlane.xlu0 %118
    %v120 = vsel %vm83, %v63, 0.0
    %121 = vadd.xlane.f32.xlu0 %v120
    %v122 = vpop.xlane.xlu0 %121
    %v123 = vsel %vm83, %v64, 0.0
    %124 = vadd.xlane.f32.xlu0 %v123
    %v125 = vpop.xlane.xlu0 %124
    %v126 = vsel %vm83, %v65, 0.0
    %127 = vadd.xlane.f32.xlu0 %v126
    %v128 = vpop.xlane.xlu0 %127
    %v129 = vsel %vm83, %v66, 0.0
    %130 = vadd.xlane.f32.xlu0 %v129
    %v131 = vpop.xlane.xlu0 %130
    %v132 = vsel %vm83, %v67, 0.0
    %133 = vadd.xlane.f32.xlu0 %v132
    %v134 = vpop.xlane.xlu0 %133
    %v135 = vsel %vm83, %v68, 0.0
    %136 = vadd.xlane.f32.xlu0 %v135
    %v137 = vpop.xlane.xlu0 %136
    %v138 = vsel %vm83, %v69, 0.0
    %139 = vadd.xlane.f32.xlu0 %v138
    %v140 = vpop.xlane.xlu0 %139
    %v141 = vsel %vm83, %v70, 0.0
    %142 = vadd.xlane.f32.xlu0 %v141
    %v143 = vpop.xlane.xlu0 %142
    %v144 = vsel %vm83, %v71, 0.0
    %145 = vadd.xlane.f32.xlu0 %v144
    %v146 = vpop.xlane.xlu0 %145
    %v147 = vsel %vm83, %v72, 0.0
    %148 = vadd.xlane.f32.xlu0 %v147
    %v149 = vpop.xlane.xlu0 %148
    %v150 = vsel %vm83, %v73, 0.0
    %151 = vadd.xlane.f32.xlu0 %v150
    %v152 = vpop.xlane.xlu0 %151
    %v153 = vsel %vm83, %v74, 0.0
    %154 = vadd.xlane.f32.xlu0 %v153
    %v155 = vpop.xlane.xlu0 %154
    %v156 = vsel %vm83, %v75, 0.0
    %157 = vadd.xlane.f32.xlu0 %v156
    %v158 = vpop.xlane.xlu0 %157
    %v159 = vsel %vm83, %v76, 0.0
    %160 = vadd.xlane.f32.xlu0 %v159
    %v161 = vpop.xlane.xlu0 %160
    %v162 = vsel %vm83, %v77, 0.0
    %163 = vadd.xlane.f32.xlu0 %v162
    %v164 = vpop.xlane.xlu0 %163
    %v165 = vsel %vm83, %v78, 0.0
    %166 = vadd.xlane.f32.xlu0 %v165
    %v167 = vpop.xlane.xlu0 %166
    %v168 = vsel %vm83, %v79, 0.0
    %169 = vadd.xlane.f32.xlu0 %v168
    %v170 = vpop.xlane.xlu0 %169
    %v171 = vsel %vm83, %v80, 0.0
    %172 = vadd.xlane.f32.xlu0 %v171
    %v173 = vpop.xlane.xlu0 %172
    %v174 = vsel %vm83, %v81, 0.0
    %175 = vadd.xlane.f32.xlu0 %v174
    %v176 = vpop.xlane.xlu0 %175
    %v177 = vsel %vm83, %v82, 0.0
    %178 = vadd.xlane.f32.xlu0 %v177
    %v179 = vpop.xlane.xlu0 %178
    %v180 = vlaneseq
    %v181 = vand.u32 %v180, 127
    %v214 = vlaneseq
    %v215 = vshrl.u32 %v214, 7
    %v216 = vsub.s32 %v181, %v215
    %v217 = vrot.slane %v86, %v216
    %v218 = vadd.s32 %v181, 4294967288
    %v219 = vlaneseq
    %v220 = vshrl.u32 %v219, 7
    %v221 = vsub.s32 %v218, %v220
    %v222 = vrot.slane %v89, %v221
    %vm223 = vcmask 130112
    %v224 = vsel %vm223, %v222, %v217
    %v225 = vadd.s32 %v181, 4294967280
    %v226 = vlaneseq
    %v227 = vshrl.u32 %v226, 7
    %v228 = vsub.s32 %v225, %v227
    %v229 = vrot.slane %v92, %v228
    %vm230 = vcmask 195712
    %v231 = vsel %vm230, %v229, %v224
    %v232 = vadd.s32 %v181, 4294967272
    %v233 = vlaneseq
    %v234 = vshrl.u32 %v233, 7
    %v235 = vsub.s32 %v232, %v234
    %v236 = vrot.slane %v95, %v235
    %vm237 = vcmask 261312
    %v238 = vsel %vm237, %v236, %v231
    %v239 = vadd.s32 %v181, 4294967264
    %v240 = vlaneseq
    %v241 = vshrl.u32 %v240, 7
    %v242 = vsub.s32 %v239, %v241
    %v243 = vrot.slane %v98, %v242
    %vm244 = vcmask 326912
    %v245 = vsel %vm244, %v243, %v238
    %v246 = vadd.s32 %v181, 4294967256
    %v247 = vlaneseq
    %v248 = vshrl.u32 %v247, 7
    %v249 = vsub.s32 %v246, %v248
    %v250 = vrot.slane %v101, %v249
    %vm251 = vcmask 392512
    %v252 = vsel %vm251, %v250, %v245
    %v253 = vadd.s32 %v181, 4294967248
    %v254 = vlaneseq
    %v255 = vshrl.u32 %v254, 7
    %v256 = vsub.s32 %v253, %v255
    %v257 = vrot.slane %v104, %v256
    %vm258 = vcmask 458112
    %v259 = vsel %vm258, %v257, %v252
    %v260 = vadd.s32 %v181, 4294967240
    %v261 = vlaneseq
    %v262 = vshrl.u32 %v261, 7
    %v263 = vsub.s32 %v260, %v262
    %v264 = vrot.slane %v107, %v263
    %vm265 = vcmask 523712
    %v266 = vsel %vm265, %v264, %v259
    %v267 = vadd.s32 %v181, 4294967232
    %v268 = vlaneseq
    %v269 = vshrl.u32 %v268, 7
    %v270 = vsub.s32 %v267, %v269
    %v271 = vrot.slane %v110, %v270
    %vm272 = vcmask 589312
    %v273 = vsel %vm272, %v271, %v266
    %v274 = vadd.s32 %v181, 4294967224
    %v275 = vlaneseq
    %v276 = vshrl.u32 %v275, 7
    %v277 = vsub.s32 %v274, %v276
    %v278 = vrot.slane %v113, %v277
    %vm279 = vcmask 654912
    %v280 = vsel %vm279, %v278, %v273
    %v281 = vadd.s32 %v181, 4294967216
    %v282 = vlaneseq
    %v283 = vshrl.u32 %v282, 7
    %v284 = vsub.s32 %v281, %v283
    %v285 = vrot.slane %v116, %v284
    %vm286 = vcmask 720512
    %v287 = vsel %vm286, %v285, %v280
    %v288 = vadd.s32 %v181, 4294967208
    %v289 = vlaneseq
    %v290 = vshrl.u32 %v289, 7
    %v291 = vsub.s32 %v288, %v290
    %v292 = vrot.slane %v119, %v291
    %vm293 = vcmask 786112
    %v294 = vsel %vm293, %v292, %v287
    %v295 = vadd.s32 %v181, 4294967200
    %v296 = vlaneseq
    %v297 = vshrl.u32 %v296, 7
    %v298 = vsub.s32 %v295, %v297
    %v299 = vrot.slane %v122, %v298
    %vm300 = vcmask 851712
    %v301 = vsel %vm300, %v299, %v294
    %v302 = vadd.s32 %v181, 4294967192
    %v303 = vlaneseq
    %v304 = vshrl.u32 %v303, 7
    %v305 = vsub.s32 %v302, %v304
    %v306 = vrot.slane %v125, %v305
    %vm307 = vcmask 917312
    %v308 = vsel %vm307, %v306, %v301
    %v309 = vadd.s32 %v181, 4294967184
    %v310 = vlaneseq
    %v311 = vshrl.u32 %v310, 7
    %v312 = vsub.s32 %v309, %v311
    %v313 = vrot.slane %v128, %v312
    %vm314 = vcmask 982912
    %v315 = vsel %vm314, %v313, %v308
    %v316 = vadd.s32 %v181, 4294967176
    %v317 = vlaneseq
    %v318 = vshrl.u32 %v317, 7
    %v319 = vsub.s32 %v316, %v318
    %v320 = vrot.slane %v131, %v319
    %vm321 = vcmask 1048512
    %v322 = vsel %vm321, %v320, %v315
    %v323 = vlaneseq
    %v324 = vshrl.u32 %v323, 7
    %v325 = vsub.s32 %v181, %v324
    %v326 = vrot.slane %v134, %v325
    %v327 = vlaneseq
    %v328 = vshrl.u32 %v327, 7
    %v329 = vsub.s32 %v218, %v328
    %v330 = vrot.slane %v137, %v329
    %v331 = vsel %vm223, %v330, %v326
    %v332 = vlaneseq
    %v333 = vshrl.u32 %v332, 7
    %v334 = vsub.s32 %v225, %v333
    %v335 = vrot.slane %v140, %v334
    %v336 = vsel %vm230, %v335, %v331
    %v337 = vlaneseq
    %v338 = vshrl.u32 %v337, 7
    %v339 = vsub.s32 %v232, %v338
    %v340 = vrot.slane %v143, %v339
    %v341 = vsel %vm237, %v340, %v336
    %v342 = vlaneseq
    %v343 = vshrl.u32 %v342, 7
    %v344 = vsub.s32 %v239, %v343
    %v345 = vrot.slane %v146, %v344
    %v346 = vsel %vm244, %v345, %v341
    %v347 = vlaneseq
    %v348 = vshrl.u32 %v347, 7
    %v349 = vsub.s32 %v246, %v348
    %v350 = vrot.slane %v149, %v349
    %v351 = vsel %vm251, %v350, %v346
    %v352 = vlaneseq
    %v353 = vshrl.u32 %v352, 7
    %v354 = vsub.s32 %v253, %v353
    %v355 = vrot.slane %v152, %v354
    %v356 = vsel %vm258, %v355, %v351
    %v357 = vlaneseq
    %v358 = vshrl.u32 %v357, 7
    %v359 = vsub.s32 %v260, %v358
    %v360 = vrot.slane %v155, %v359
    %v361 = vsel %vm265, %v360, %v356
    %v362 = vlaneseq
    %v363 = vshrl.u32 %v362, 7
    %v364 = vsub.s32 %v267, %v363
    %v365 = vrot.slane %v158, %v364
    %v366 = vsel %vm272, %v365, %v361
    %v367 = vlaneseq
    %v368 = vshrl.u32 %v367, 7
    %v369 = vsub.s32 %v274, %v368
    %v370 = vrot.slane %v161, %v369
    %v371 = vsel %vm279, %v370, %v366
    %v372 = vlaneseq
    %v373 = vshrl.u32 %v372, 7
    %v374 = vsub.s32 %v281, %v373
    %v375 = vrot.slane %v164, %v374
    %v376 = vsel %vm286, %v375, %v371
    %v377 = vlaneseq
    %v378 = vshrl.u32 %v377, 7
    %v379 = vsub.s32 %v288, %v378
    %v380 = vrot.slane %v167, %v379
    %v381 = vsel %vm293, %v380, %v376
    %v382 = vlaneseq
    %v383 = vshrl.u32 %v382, 7
    %v384 = vsub.s32 %v295, %v383
    %v385 = vrot.slane %v170, %v384
    %v386 = vsel %vm300, %v385, %v381
    %v387 = vlaneseq
    %v388 = vshrl.u32 %v387, 7
    %v389 = vsub.s32 %v302, %v388
    %v390 = vrot.slane %v173, %v389
    %v391 = vsel %vm307, %v390, %v386
    %v392 = vlaneseq
    %v393 = vshrl.u32 %v392, 7
    %v394 = vsub.s32 %v309, %v393
    %v395 = vrot.slane %v176, %v394
    %v396 = vsel %vm314, %v395, %v391
    %v397 = vlaneseq
    %v398 = vshrl.u32 %v397, 7
    %v399 = vsub.s32 %v316, %v398
    %v400 = vrot.slane %v179, %v399
    %v401 = vsel %vm321, %v400, %v396
    %vm402 = vcmask 1041409
    %v403 = vsel %vm402, %v401, %v322
    %vm405 = vcmask 1041408
    %v406 = vsel %vm405, %v403, -inf
    %407 = vmax.xlane.f32.xlu0 %v406
    %v408 = vpop.xlane.xlu0 %407
    %v410 = vlaneseq
    %v411 = vshrl.u32 %v410, 7
    %v412 = vsub.s32 0, %v411
    %v413 = vrot.slane %v408, %v412
    %v414 = vlaneseq
    %v415 = vshrl.u32 %v414, 7
    %v416 = vsub.s32 1, %v415
    %v417 = vrot.slane %v408, %v416
    %vm420 = vcmp.eq.f32.partialorder %v86, %v413
    %vm421 = vcmp.eq.f32.partialorder %v89, %v413
    %vm422 = vcmp.eq.f32.partialorder %v92, %v413
    %vm423 = vcmp.eq.f32.partialorder %v95, %v413
    %vm424 = vcmp.eq.f32.partialorder %v98, %v413
    %vm425 = vcmp.eq.f32.partialorder %v101, %v413
    %vm426 = vcmp.eq.f32.partialorder %v104, %v413
    %vm427 = vcmp.eq.f32.partialorder %v107, %v413
    %vm428 = vcmp.eq.f32.partialorder %v110, %v413
    %vm429 = vcmp.eq.f32.partialorder %v113, %v413
    %vm430 = vcmp.eq.f32.partialorder %v116, %v413
    %vm431 = vcmp.eq.f32.partialorder %v119, %v413
    %vm432 = vcmp.eq.f32.partialorder %v122, %v413
    %vm433 = vcmp.eq.f32.partialorder %v125, %v413
    %vm434 = vcmp.eq.f32.partialorder %v128, %v413
    %vm435 = vcmp.eq.f32.partialorder %v131, %v413
    %vm436 = vcmp.eq.f32.partialorder %v134, %v417
    %vm437 = vcmp.eq.f32.partialorder %v137, %v417
    %vm438 = vcmp.eq.f32.partialorder %v140, %v417
    %vm439 = vcmp.eq.f32.partialorder %v143, %v417
    %vm440 = vcmp.eq.f32.partialorder %v146, %v417
    %vm441 = vcmp.eq.f32.partialorder %v149, %v417
    %vm442 = vcmp.eq.f32.partialorder %v152, %v417
    %vm443 = vcmp.eq.f32.partialorder %v155, %v417
    %vm444 = vcmp.eq.f32.partialorder %v158, %v417
    %vm445 = vcmp.eq.f32.partialorder %v161, %v417
    %vm446 = vcmp.eq.f32.partialorder %v164, %v417
    %vm447 = vcmp.eq.f32.partialorder %v167, %v417
    %vm448 = vcmp.eq.f32.partialorder %v170, %v417
    %vm449 = vcmp.eq.f32.partialorder %v173, %v417
    %vm450 = vcmp.eq.f32.partialorder %v176, %v417
    %vm451 = vcmp.eq.f32.partialorder %v179, %v417
    %453 = vbcast.lane.b32.xlu0 %v181, 256
    %v454 = vpop.permute.xlu0 %453
    %s456 = sor.u32 256, 8
    %457 = vbcast.lane.b32.xlu0 %v181, %s456
    %v458 = vpop.permute.xlu0 %457
    %s460 = sor.u32 256, 16
    %461 = vbcast.lane.b32.xlu0 %v181, %s460
    %v462 = vpop.permute.xlu0 %461
    %s464 = sor.u32 256, 24
    %465 = vbcast.lane.b32.xlu0 %v181, %s464
    %v466 = vpop.permute.xlu0 %465
    %s468 = sor.u32 256, 32
    %469 = vbcast.lane.b32.xlu0 %v181, %s468
    %v470 = vpop.permute.xlu0 %469
    %s472 = sor.u32 256, 40
    %473 = vbcast.lane.b32.xlu0 %v181, %s472
    %v474 = vpop.permute.xlu0 %473
    %s476 = sor.u32 256, 48
    %477 = vbcast.lane.b32.xlu0 %v181, %s476
    %v478 = vpop.permute.xlu0 %477
    %s480 = sor.u32 256, 56
    %481 = vbcast.lane.b32.xlu0 %v181, %s480
    %v482 = vpop.permute.xlu0 %481
    %s484 = sor.u32 256, 64
    %485 = vbcast.lane.b32.xlu0 %v181, %s484
    %v486 = vpop.permute.xlu0 %485
    %s488 = sor.u32 256, 72
    %489 = vbcast.lane.b32.xlu0 %v181, %s488
    %v490 = vpop.permute.xlu0 %489
    %s492 = sor.u32 256, 80
    %493 = vbcast.lane.b32.xlu0 %v181, %s492
    %v494 = vpop.permute.xlu0 %493
    %s496 = sor.u32 256, 88
    %497 = vbcast.lane.b32.xlu0 %v181, %s496
    %v498 = vpop.permute.xlu0 %497
    %s500 = sor.u32 256, 96
    %501 = vbcast.lane.b32.xlu0 %v181, %s500
    %v502 = vpop.permute.xlu0 %501
    %s504 = sor.u32 256, 104
    %505 = vbcast.lane.b32.xlu0 %v181, %s504
    %v506 = vpop.permute.xlu0 %505
    %s508 = sor.u32 256, 112
    %509 = vbcast.lane.b32.xlu0 %v181, %s508
    %v510 = vpop.permute.xlu0 %509
    %s512 = sor.u32 256, 120
    %513 = vbcast.lane.b32.xlu0 %v181, %s512
    %v514 = vpop.permute.xlu0 %513
    %v515 = vsel %vm420, %v454, 128
    %v516 = vsel %vm421, %v458, 128
    %v517 = vsel %vm422, %v462, 128
    %v518 = vsel %vm423, %v466, 128
    %v519 = vsel %vm424, %v470, 128
    %v520 = vsel %vm425, %v474, 128
    %v521 = vsel %vm426, %v478, 128
    %v522 = vsel %vm427, %v482, 128
    %v523 = vsel %vm428, %v486, 128
    %v524 = vsel %vm429, %v490, 128
    %v525 = vsel %vm430, %v494, 128
    %v526 = vsel %vm431, %v498, 128
    %v527 = vsel %vm432, %v502, 128
    %v528 = vsel %vm433, %v506, 128
    %v529 = vsel %vm434, %v510, 128
    %v530 = vsel %vm435, %v514, 128
    %v531 = vsel %vm436, %v454, 128
    %v532 = vsel %vm437, %v458, 128
    %v533 = vsel %vm438, %v462, 128
    %v534 = vsel %vm439, %v466, 128
    %v535 = vsel %vm440, %v470, 128
    %v536 = vsel %vm441, %v474, 128
    %v537 = vsel %vm442, %v478, 128
    %v538 = vsel %vm443, %v482, 128
    %v539 = vsel %vm444, %v486, 128
    %v540 = vsel %vm445, %v490, 128
    %v541 = vsel %vm446, %v494, 128
    %v542 = vsel %vm447, %v498, 128
    %v543 = vsel %vm448, %v502, 128
    %v544 = vsel %vm449, %v506, 128
    %v545 = vsel %vm450, %v510, 128
    %v546 = vsel %vm451, %v514, 128
    %547 = vset.pattern.permute.xlu0 0
    %548 = vperm.xlu0 %547, %v515
    %v549 = vpop.permute.xlu0 %548
    %550 = vset.pattern.permute.xlu0 0
    %551 = vperm.xlu0 %550, %v516
    %v552 = vpop.permute.xlu0 %551
    %553 = vset.pattern.permute.xlu0 0
    %554 = vperm.xlu0 %553, %v517
    %v555 = vpop.permute.xlu0 %554
    %556 = vset.pattern.permute.xlu0 0
    %557 = vperm.xlu0 %556, %v518
    %v558 = vpop.permute.xlu0 %557
    %559 = vset.pattern.permute.xlu0 0
    %560 = vperm.xlu0 %559, %v519
    %v561 = vpop.permute.xlu0 %560
    %562 = vset.pattern.permute.xlu0 0
    %563 = vperm.xlu0 %562, %v520
    %v564 = vpop.permute.xlu0 %563
    %565 = vset.pattern.permute.xlu0 0
    %566 = vperm.xlu0 %565, %v521
    %v567 = vpop.permute.xlu0 %566
    %568 = vset.pattern.permute.xlu0 0
    %569 = vperm.xlu0 %568, %v522
    %v570 = vpop.permute.xlu0 %569
    %571 = vset.pattern.permute.xlu0 0
    %572 = vperm.xlu0 %571, %v523
    %v573 = vpop.permute.xlu0 %572
    %574 = vset.pattern.permute.xlu0 0
    %575 = vperm.xlu0 %574, %v524
    %v576 = vpop.permute.xlu0 %575
    %577 = vset.pattern.permute.xlu0 0
    %578 = vperm.xlu0 %577, %v525
    %v579 = vpop.permute.xlu0 %578
    %580 = vset.pattern.permute.xlu0 0
    %581 = vperm.xlu0 %580, %v526
    %v582 = vpop.permute.xlu0 %581
    %583 = vset.pattern.permute.xlu0 0
    %584 = vperm.xlu0 %583, %v527
    %v585 = vpop.permute.xlu0 %584
    %586 = vset.pattern.permute.xlu0 0
    %587 = vperm.xlu0 %586, %v528
    %v588 = vpop.permute.xlu0 %587
    %589 = vset.pattern.permute.xlu0 0
    %590 = vperm.xlu0 %589, %v529
    %v591 = vpop.permute.xlu0 %590
    %592 = vset.pattern.permute.xlu0 0
    %593 = vperm.xlu0 %592, %v530
    %v594 = vpop.permute.xlu0 %593
    %595 = vset.pattern.permute.xlu0 0
    %596 = vperm.xlu0 %595, %v531
    %v597 = vpop.permute.xlu0 %596
    %598 = vset.pattern.permute.xlu0 0
    %599 = vperm.xlu0 %598, %v532
    %v600 = vpop.permute.xlu0 %599
    %601 = vset.pattern.permute.xlu0 0
    %602 = vperm.xlu0 %601, %v533
    %v603 = vpop.permute.xlu0 %602
    %604 = vset.pattern.permute.xlu0 0
    %605 = vperm.xlu0 %604, %v534
    %v606 = vpop.permute.xlu0 %605
    %607 = vset.pattern.permute.xlu0 0
    %608 = vperm.xlu0 %607, %v535
    %v609 = vpop.permute.xlu0 %608
    %610 = vset.pattern.permute.xlu0 0
    %611 = vperm.xlu0 %610, %v536
    %v612 = vpop.permute.xlu0 %611
    %613 = vset.pattern.permute.xlu0 0
    %614 = vperm.xlu0 %613, %v537
    %v615 = vpop.permute.xlu0 %614
    %616 = vset.pattern.permute.xlu0 0
    %617 = vperm.xlu0 %616, %v538
    %v618 = vpop.permute.xlu0 %617
    %619 = vset.pattern.permute.xlu0 0
    %620 = vperm.xlu0 %619, %v539
    %v621 = vpop.permute.xlu0 %620
    %622 = vset.pattern.permute.xlu0 0
    %623 = vperm.xlu0 %622, %v540
    %v624 = vpop.permute.xlu0 %623
    %625 = vset.pattern.permute.xlu0 0
    %626 = vperm.xlu0 %625, %v541
    %v627 = vpop.permute.xlu0 %626
    %628 = vset.pattern.permute.xlu0 0
    %629 = vperm.xlu0 %628, %v542
    %v630 = vpop.permute.xlu0 %629
    %631 = vset.pattern.permute.xlu0 0
    %632 = vperm.xlu0 %631, %v543
    %v633 = vpop.permute.xlu0 %632
    %634 = vset.pattern.permute.xlu0 0
    %635 = vperm.xlu0 %634, %v544
    %v636 = vpop.permute.xlu0 %635
    %637 = vset.pattern.permute.xlu0 0
    %638 = vperm.xlu0 %637, %v545
    %v639 = vpop.permute.xlu0 %638
    %640 = vset.pattern.permute.xlu0 0
    %641 = vperm.xlu0 %640, %v546
    %v642 = vpop.permute.xlu0 %641
    %v643 = vlaneseq
    %v644 = vshrl.u32 %v643, 7
    %v645 = vsub.s32 %v181, %v644
    %v646 = vrot.slane %v549, %v645
    %v647 = vlaneseq
    %v648 = vshrl.u32 %v647, 7
    %v649 = vsub.s32 %v218, %v648
    %v650 = vrot.slane %v552, %v649
    %v651 = vsel %vm223, %v650, %v646
    %v652 = vlaneseq
    %v653 = vshrl.u32 %v652, 7
    %v654 = vsub.s32 %v225, %v653
    %v655 = vrot.slane %v555, %v654
    %v656 = vsel %vm230, %v655, %v651
    %v657 = vlaneseq
    %v658 = vshrl.u32 %v657, 7
    %v659 = vsub.s32 %v232, %v658
    %v660 = vrot.slane %v558, %v659
    %v661 = vsel %vm237, %v660, %v656
    %v662 = vlaneseq
    %v663 = vshrl.u32 %v662, 7
    %v664 = vsub.s32 %v239, %v663
    %v665 = vrot.slane %v561, %v664
    %v666 = vsel %vm244, %v665, %v661
    %v667 = vlaneseq
    %v668 = vshrl.u32 %v667, 7
    %v669 = vsub.s32 %v246, %v668
    %v670 = vrot.slane %v564, %v669
    %v671 = vsel %vm251, %v670, %v666
    %v672 = vlaneseq
    %v673 = vshrl.u32 %v672, 7
    %v674 = vsub.s32 %v253, %v673
    %v675 = vrot.slane %v567, %v674
    %v676 = vsel %vm258, %v675, %v671
    %v677 = vlaneseq
    %v678 = vshrl.u32 %v677, 7
    %v679 = vsub.s32 %v260, %v678
    %v680 = vrot.slane %v570, %v679
    %v681 = vsel %vm265, %v680, %v676
    %v682 = vlaneseq
    %v683 = vshrl.u32 %v682, 7
    %v684 = vsub.s32 %v267, %v683
    %v685 = vrot.slane %v573, %v684
    %v686 = vsel %vm272, %v685, %v681
    %v687 = vlaneseq
    %v688 = vshrl.u32 %v687, 7
    %v689 = vsub.s32 %v274, %v688
    %v690 = vrot.slane %v576, %v689
    %v691 = vsel %vm279, %v690, %v686
    %v692 = vlaneseq
    %v693 = vshrl.u32 %v692, 7
    %v694 = vsub.s32 %v281, %v693
    %v695 = vrot.slane %v579, %v694
    %v696 = vsel %vm286, %v695, %v691
    %v697 = vlaneseq
    %v698 = vshrl.u32 %v697, 7
    %v699 = vsub.s32 %v288, %v698
    %v700 = vrot.slane %v582, %v699
    %v701 = vsel %vm293, %v700, %v696
    %v702 = vlaneseq
    %v703 = vshrl.u32 %v702, 7
    %v704 = vsub.s32 %v295, %v703
    %v705 = vrot.slane %v585, %v704
    %v706 = vsel %vm300, %v705, %v701
    %v707 = vlaneseq
    %v708 = vshrl.u32 %v707, 7
    %v709 = vsub.s32 %v302, %v708
    %v710 = vrot.slane %v588, %v709
    %v711 = vsel %vm307, %v710, %v706
    %v712 = vlaneseq
    %v713 = vshrl.u32 %v712, 7
    %v714 = vsub.s32 %v309, %v713
    %v715 = vrot.slane %v591, %v714
    %v716 = vsel %vm314, %v715, %v711
    %v717 = vlaneseq
    %v718 = vshrl.u32 %v717, 7
    %v719 = vsub.s32 %v316, %v718
    %v720 = vrot.slane %v594, %v719
    %v721 = vsel %vm321, %v720, %v716
    %v722 = vlaneseq
    %v723 = vshrl.u32 %v722, 7
    %v724 = vsub.s32 %v181, %v723
    %v725 = vrot.slane %v597, %v724
    %v726 = vlaneseq
    %v727 = vshrl.u32 %v726, 7
    %v728 = vsub.s32 %v218, %v727
    %v729 = vrot.slane %v600, %v728
    %v730 = vsel %vm223, %v729, %v725
    %v731 = vlaneseq
    %v732 = vshrl.u32 %v731, 7
    %v733 = vsub.s32 %v225, %v732
    %v734 = vrot.slane %v603, %v733
    %v735 = vsel %vm230, %v734, %v730
    %v736 = vlaneseq
    %v737 = vshrl.u32 %v736, 7
    %v738 = vsub.s32 %v232, %v737
    %v739 = vrot.slane %v606, %v738
    %v740 = vsel %vm237, %v739, %v735
    %v741 = vlaneseq
    %v742 = vshrl.u32 %v741, 7
    %v743 = vsub.s32 %v239, %v742
    %v744 = vrot.slane %v609, %v743
    %v745 = vsel %vm244, %v744, %v740
    %v746 = vlaneseq
    %v747 = vshrl.u32 %v746, 7
    %v748 = vsub.s32 %v246, %v747
    %v749 = vrot.slane %v612, %v748
    %v750 = vsel %vm251, %v749, %v745
    %v751 = vlaneseq
    %v752 = vshrl.u32 %v751, 7
    %v753 = vsub.s32 %v253, %v752
    %v754 = vrot.slane %v615, %v753
    %v755 = vsel %vm258, %v754, %v750
    %v756 = vlaneseq
    %v757 = vshrl.u32 %v756, 7
    %v758 = vsub.s32 %v260, %v757
    %v759 = vrot.slane %v618, %v758
    %v760 = vsel %vm265, %v759, %v755
    %v761 = vlaneseq
    %v762 = vshrl.u32 %v761, 7
    %v763 = vsub.s32 %v267, %v762
    %v764 = vrot.slane %v621, %v763
    %v765 = vsel %vm272, %v764, %v760
    %v766 = vlaneseq
    %v767 = vshrl.u32 %v766, 7
    %v768 = vsub.s32 %v274, %v767
    %v769 = vrot.slane %v624, %v768
    %v770 = vsel %vm279, %v769, %v765
    %v771 = vlaneseq
    %v772 = vshrl.u32 %v771, 7
    %v773 = vsub.s32 %v281, %v772
    %v774 = vrot.slane %v627, %v773
    %v775 = vsel %vm286, %v774, %v770
    %v776 = vlaneseq
    %v777 = vshrl.u32 %v776, 7
    %v778 = vsub.s32 %v288, %v777
    %v779 = vrot.slane %v630, %v778
    %v780 = vsel %vm293, %v779, %v775
    %v781 = vlaneseq
    %v782 = vshrl.u32 %v781, 7
    %v783 = vsub.s32 %v295, %v782
    %v784 = vrot.slane %v633, %v783
    %v785 = vsel %vm300, %v784, %v780
    %v786 = vlaneseq
    %v787 = vshrl.u32 %v786, 7
    %v788 = vsub.s32 %v302, %v787
    %v789 = vrot.slane %v636, %v788
    %v790 = vsel %vm307, %v789, %v785
    %v791 = vlaneseq
    %v792 = vshrl.u32 %v791, 7
    %v793 = vsub.s32 %v309, %v792
    %v794 = vrot.slane %v639, %v793
    %v795 = vsel %vm314, %v794, %v790
    %v796 = vlaneseq
    %v797 = vshrl.u32 %v796, 7
    %v798 = vsub.s32 %v316, %v797
    %v799 = vrot.slane %v642, %v798
    %v800 = vsel %vm321, %v799, %v795
    %v801 = vsel %vm402, %v800, %v721
    %v802 = vsel %vm405, %v801, 2147483647
    %v803 = vand.u32 %v802, 65535
    %v804 = vshra.s32 %v802, 16
    %v805 = vcvt.s32.f32 %v803
    %v806 = vcvt.s32.f32 %v804
    %807 = vmin.xlane.f32.xlu0 %v806
    %v808 = vpop.xlane.xlu0 %807
    %vm809 = vcmp.eq.f32.partialorder %v806, %v808
    %v810 = vsel %vm809, %v805, inf
    %811 = vmin.xlane.f32.xlu0 %v810
    %v812 = vpop.xlane.xlu0 %811
    %v813 = vcvt.f32.s32 %v812
    %v814 = vcvt.f32.s32 %v808
    %v815 = vshll.u32 %v814, 16
    %v816 = vadd.s32 %v815, %v813
    %vm817 = vcmp.eq.s32.totalorder %v181, 0
    %v818 = vsel %vm817, %v816, 0
    %vm819 = vcmp.eq.s32.totalorder %v181, %v816
    %v820 = vsel %vm819, -3.4028235e+38, %v403
    %v821 = vsel %vm405, %v820, -inf
    %822 = vmax.xlane.f32.xlu0 %v821
    %v823 = vpop.xlane.xlu0 %822
    %vm824 = vcmp.eq.f32.partialorder %v820, %v823
    %v825 = vsel %vm824, %v181, 128
    %v826 = vsel %vm405, %v825, 2147483647
    %v827 = vand.u32 %v826, 65535
    %v828 = vshra.s32 %v826, 16
    %v829 = vcvt.s32.f32 %v827
    %v830 = vcvt.s32.f32 %v828
    %831 = vmin.xlane.f32.xlu0 %v830
    %v832 = vpop.xlane.xlu0 %831
    %vm833 = vcmp.eq.f32.partialorder %v830, %v832
    %v834 = vsel %vm833, %v829, inf
    %835 = vmin.xlane.f32.xlu0 %v834
    %v836 = vpop.xlane.xlu0 %835
    %v837 = vcvt.f32.s32 %v836
    %v838 = vcvt.f32.s32 %v832
    %v839 = vshll.u32 %v838, 16
    %v840 = vadd.s32 %v839, %v837
    %vm841 = vcmp.eq.s32.totalorder %v181, 1
    %v842 = vsel %vm841, %v840, %v818
    %vm843 = vcmp.eq.s32.totalorder %v181, %v840
    %v844 = vsel %vm843, -3.4028235e+38, %v820
    %v845 = vsel %vm405, %v844, -inf
    %846 = vmax.xlane.f32.xlu0 %v845
    %v847 = vpop.xlane.xlu0 %846
    %vm848 = vcmp.eq.f32.partialorder %v844, %v847
    %v849 = vsel %vm848, %v181, 128
    %v850 = vsel %vm405, %v849, 2147483647
    %v851 = vand.u32 %v850, 65535
    %v852 = vshra.s32 %v850, 16
    %v853 = vcvt.s32.f32 %v851
    %v854 = vcvt.s32.f32 %v852
    %855 = vmin.xlane.f32.xlu0 %v854
    %v856 = vpop.xlane.xlu0 %855
    %vm857 = vcmp.eq.f32.partialorder %v854, %v856
    %v858 = vsel %vm857, %v853, inf
    %859 = vmin.xlane.f32.xlu0 %v858
    %v860 = vpop.xlane.xlu0 %859
    %v861 = vcvt.f32.s32 %v860
    %v862 = vcvt.f32.s32 %v856
    %v863 = vshll.u32 %v862, 16
    %v864 = vadd.s32 %v863, %v861
    %vm865 = vcmp.eq.s32.totalorder %v181, 2
    %v866 = vsel %vm865, %v864, %v842
    %vm867 = vcmp.eq.s32.totalorder %v181, %v864
    %v868 = vsel %vm867, -3.4028235e+38, %v844
    %v869 = vsel %vm405, %v868, -inf
    %870 = vmax.xlane.f32.xlu0 %v869
    %v871 = vpop.xlane.xlu0 %870
    %vm872 = vcmp.eq.f32.partialorder %v868, %v871
    %v873 = vsel %vm872, %v181, 128
    %v874 = vsel %vm405, %v873, 2147483647
    %v875 = vand.u32 %v874, 65535
    %v876 = vshra.s32 %v874, 16
    %v877 = vcvt.s32.f32 %v875
    %v878 = vcvt.s32.f32 %v876
    %879 = vmin.xlane.f32.xlu0 %v878
    %v880 = vpop.xlane.xlu0 %879
    %vm881 = vcmp.eq.f32.partialorder %v878, %v880
    %v882 = vsel %vm881, %v877, inf
    %883 = vmin.xlane.f32.xlu0 %v882
    %v884 = vpop.xlane.xlu0 %883
    %v885 = vcvt.f32.s32 %v884
    %v886 = vcvt.f32.s32 %v880
    %v887 = vshll.u32 %v886, 16
    %v888 = vadd.s32 %v887, %v885
    %vm889 = vcmp.eq.s32.totalorder %v181, 3
    %v890 = vsel %vm889, %v888, %v866
    %vm891 = vcmp.eq.s32.totalorder %v181, %v888
    %v892 = vsel %vm891, -3.4028235e+38, %v868
    %v893 = vsel %vm405, %v892, -inf
    %894 = vmax.xlane.f32.xlu0 %v893
    %v895 = vpop.xlane.xlu0 %894
    %vm896 = vcmp.eq.f32.partialorder %v892, %v895
    %v897 = vsel %vm896, %v181, 128
    %v898 = vsel %vm405, %v897, 2147483647
    %v899 = vand.u32 %v898, 65535
    %v900 = vshra.s32 %v898, 16
    %v901 = vcvt.s32.f32 %v899
    %v902 = vcvt.s32.f32 %v900
    %903 = vmin.xlane.f32.xlu0 %v902
    %v904 = vpop.xlane.xlu0 %903
    %vm905 = vcmp.eq.f32.partialorder %v902, %v904
    %v906 = vsel %vm905, %v901, inf
    %907 = vmin.xlane.f32.xlu0 %v906
    %v908 = vpop.xlane.xlu0 %907
    %v909 = vcvt.f32.s32 %v908
    %v910 = vcvt.f32.s32 %v904
    %v911 = vshll.u32 %v910, 16
    %v912 = vadd.s32 %v911, %v909
    %vm913 = vcmp.eq.s32.totalorder %v181, 4
    %v914 = vsel %vm913, %v912, %v890
    %vm915 = vcmp.eq.s32.totalorder %v181, %v912
    %v916 = vsel %vm915, -3.4028235e+38, %v892
    %v917 = vsel %vm405, %v916, -inf
    %918 = vmax.xlane.f32.xlu0 %v917
    %v919 = vpop.xlane.xlu0 %918
    %vm920 = vcmp.eq.f32.partialorder %v916, %v919
    %v921 = vsel %vm920, %v181, 128
    %v922 = vsel %vm405, %v921, 2147483647
    %v923 = vand.u32 %v922, 65535
    %v924 = vshra.s32 %v922, 16
    %v925 = vcvt.s32.f32 %v923
    %v926 = vcvt.s32.f32 %v924
    %927 = vmin.xlane.f32.xlu0 %v926
    %v928 = vpop.xlane.xlu0 %927
    %vm929 = vcmp.eq.f32.partialorder %v926, %v928
    %v930 = vsel %vm929, %v925, inf
    %931 = vmin.xlane.f32.xlu0 %v930
    %v932 = vpop.xlane.xlu0 %931
    %v933 = vcvt.f32.s32 %v932
    %v934 = vcvt.f32.s32 %v928
    %v935 = vshll.u32 %v934, 16
    %v936 = vadd.s32 %v935, %v933
    %vm937 = vcmp.eq.s32.totalorder %v181, 5
    %v938 = vsel %vm937, %v936, %v914
    %vm939 = vcmp.eq.s32.totalorder %v181, %v936
    %v940 = vsel %vm939, -3.4028235e+38, %v916
    %v941 = vsel %vm405, %v940, -inf
    %942 = vmax.xlane.f32.xlu0 %v941
    %v943 = vpop.xlane.xlu0 %942
    %vm944 = vcmp.eq.f32.partialorder %v940, %v943
    %v945 = vsel %vm944, %v181, 128
    %v946 = vsel %vm405, %v945, 2147483647
    %v947 = vand.u32 %v946, 65535
    %v948 = vshra.s32 %v946, 16
    %v949 = vcvt.s32.f32 %v947
    %v950 = vcvt.s32.f32 %v948
    %951 = vmin.xlane.f32.xlu0 %v950
    %v952 = vpop.xlane.xlu0 %951
    %vm953 = vcmp.eq.f32.partialorder %v950, %v952
    %v954 = vsel %vm953, %v949, inf
    %955 = vmin.xlane.f32.xlu0 %v954
    %v956 = vpop.xlane.xlu0 %955
    %v957 = vcvt.f32.s32 %v956
    %v958 = vcvt.f32.s32 %v952
    %v959 = vshll.u32 %v958, 16
    %v960 = vadd.s32 %v959, %v957
    %vm961 = vcmp.eq.s32.totalorder %v181, 6
    %v962 = vsel %vm961, %v960, %v938
    %vm963 = vcmp.eq.s32.totalorder %v181, %v960
    %v964 = vsel %vm963, -3.4028235e+38, %v940
    %v965 = vsel %vm405, %v964, -inf
    %966 = vmax.xlane.f32.xlu0 %v965
    %v967 = vpop.xlane.xlu0 %966
    %vm968 = vcmp.eq.f32.partialorder %v964, %v967
    %v969 = vsel %vm968, %v181, 128
    %v970 = vsel %vm405, %v969, 2147483647
    %v971 = vand.u32 %v970, 65535
    %v972 = vshra.s32 %v970, 16
    %v973 = vcvt.s32.f32 %v971
    %v974 = vcvt.s32.f32 %v972
    %975 = vmin.xlane.f32.xlu0 %v974
    %v976 = vpop.xlane.xlu0 %975
    %vm977 = vcmp.eq.f32.partialorder %v974, %v976
    %v978 = vsel %vm977, %v973, inf
    %979 = vmin.xlane.f32.xlu0 %v978
    %v980 = vpop.xlane.xlu0 %979
    %v981 = vcvt.f32.s32 %v980
    %v982 = vcvt.f32.s32 %v976
    %v983 = vshll.u32 %v982, 16
    %v984 = vadd.s32 %v983, %v981
    %vm985 = vcmp.eq.s32.totalorder %v181, 7
    %v986 = vsel %vm985, %v984, %v962
    %v987 = vlaneseq
    %v988 = vshrl.u32 %v987, 7
    %v989 = vmul.u32 %v988, 128
    %v990 = vadd.s32 %v986, %v989
    %v991 = vadd.s32 %v181, 128
    %v992 = vlaneseq
    %v993 = vshrl.u32 %v992, 7
    %v994 = vsub.s32 0, %v993
    %v995 = vrot.slane %v990, %v994
    %997 = vbcast.lane.b32.xlu0 %v995, 256
    %v998 = vpop.permute.xlu0 %997
    %v999 = vlaneseq
    %v1000 = vshrl.u32 %v999, 7
    %v1001 = vsub.s32 1, %v1000
    %v1002 = vrot.slane %v990, %v1001
    %1004 = vbcast.lane.b32.xlu0 %v1002, 256
    %v1005 = vpop.permute.xlu0 %1004
    %vm1006 = vcmp.eq.s32.totalorder %v181, %v998
    %vm1007 = vcmp.eq.s32.totalorder %v991, %v998
    %vm1008 = vcmp.eq.s32.totalorder %v181, %v1005
    %vm1009 = vcmp.eq.s32.totalorder %v991, %v1005
    %v1010 = vsel %vm1006, 1, 0
    %v1011 = vsel %vm1007, 1, 0
    %v1012 = vsel %vm1008, 1, 0
    %v1013 = vsel %vm1009, 1, 0
    %v1014 = vcvt.s32.f32 %v1010
    %v1015 = vcvt.s32.f32 %v1011
    %v1016 = vcvt.s32.f32 %v1012
    %v1017 = vcvt.s32.f32 %v1013
    %1018 = vmatprep.subr.mxu0 0.0
    %v1019 = vand.u32 %v12, 4294901760
    %1020 = vmatpush1.msra.mxu0 %v1019
    %1021 = vmatprep.subr.mxu0 0.0
    %v1022 = vand.u32 %v13, 4294901760
    %1023 = vmatpush1.msra.mxu0 %v1022
    %1024 = vmatprep.subr.mxu0 0.0
    %v1025 = vand.u32 %v14, 4294901760
    %1026 = vmatpush1.msra.mxu0 %v1025
    %1027 = vmatprep.subr.mxu0 0.0
    %v1028 = vand.u32 %v15, 4294901760
    %1029 = vmatpush1.msra.mxu0 %v1028
    %1030 = vmatprep.subr.mxu0 0.0
    %v1031 = vand.u32 %v16, 4294901760
    %1032 = vmatpush1.msra.mxu0 %v1031
    %1033 = vmatprep.subr.mxu0 0.0
    %v1034 = vand.u32 %v17, 4294901760
    %1035 = vmatpush1.msra.mxu0 %v1034
    %1036 = vmatprep.subr.mxu0 0.0
    %v1037 = vand.u32 %v18, 4294901760
    %1038 = vmatpush1.msra.mxu0 %v1037
    %1039 = vmatprep.subr.mxu0 0.0
    %v1040 = vand.u32 %v19, 4294901760
    %1041 = vmatpush1.msra.mxu0 %v1040
    %1042 = vmatprep.subr.mxu0 0.0
    %v1043 = vand.u32 %v20, 4294901760
    %1044 = vmatpush1.msra.mxu0 %v1043
    %1045 = vmatprep.subr.mxu0 0.0
    %v1046 = vand.u32 %v21, 4294901760
    %1047 = vmatpush1.msra.mxu0 %v1046
    %1048 = vmatprep.subr.mxu0 0.0
    %v1049 = vand.u32 %v22, 4294901760
    %1050 = vmatpush1.msra.mxu0 %v1049
    %1051 = vmatprep.subr.mxu0 0.0
    %v1052 = vand.u32 %v23, 4294901760
    %1053 = vmatpush1.msra.mxu0 %v1052
    %1054 = vmatprep.subr.mxu0 0.0
    %v1055 = vand.u32 %v24, 4294901760
    %1056 = vmatpush1.msra.mxu0 %v1055
    %1057 = vmatprep.subr.mxu0 0.0
    %v1058 = vand.u32 %v25, 4294901760
    %1059 = vmatpush1.msra.mxu0 %v1058
    %1060 = vmatprep.subr.mxu0 0.0
    %v1061 = vand.u32 %v26, 4294901760
    %1062 = vmatpush1.msra.mxu0 %v1061
    %1063 = vmatprep.subr.mxu0 0.0
    %v1064 = vand.u32 %v27, 4294901760
    %1065 = vmatpush1.msra.mxu0 %v1064
    %1066 = vmatprep.subr.mxu0 0.0
    %v1067 = vand.u32 %v28, 4294901760
    %1068 = vmatpush1.msra.mxu0 %v1067
    %1069 = vmatprep.subr.mxu0 0.0
    %v1070 = vand.u32 %v29, 4294901760
    %1071 = vmatpush1.msra.mxu0 %v1070
    %1072 = vmatprep.subr.mxu0 0.0
    %v1073 = vand.u32 %v30, 4294901760
    %1074 = vmatpush1.msra.mxu0 %v1073
    %1075 = vmatprep.subr.mxu0 0.0
    %v1076 = vand.u32 %v31, 4294901760
    %1077 = vmatpush1.msra.mxu0 %v1076
    %1078 = vmatprep.subr.mxu0 0.0
    %v1079 = vand.u32 %v32, 4294901760
    %1080 = vmatpush1.msra.mxu0 %v1079
    %1081 = vmatprep.subr.mxu0 0.0
    %v1082 = vand.u32 %v33, 4294901760
    %1083 = vmatpush1.msra.mxu0 %v1082
    %1084 = vmatprep.subr.mxu0 0.0
    %v1085 = vand.u32 %v34, 4294901760
    %1086 = vmatpush1.msra.mxu0 %v1085
    %1087 = vmatprep.subr.mxu0 0.0
    %v1088 = vand.u32 %v35, 4294901760
    %1089 = vmatpush1.msra.mxu0 %v1088
    %1090 = vmatprep.subr.mxu0 0.0
    %v1091 = vand.u32 %v36, 4294901760
    %1092 = vmatpush1.msra.mxu0 %v1091
    %1093 = vmatprep.subr.mxu0 0.0
    %v1094 = vand.u32 %v37, 4294901760
    %1095 = vmatpush1.msra.mxu0 %v1094
    %1096 = vmatprep.subr.mxu0 0.0
    %v1097 = vand.u32 %v38, 4294901760
    %1098 = vmatpush1.msra.mxu0 %v1097
    %1099 = vmatprep.subr.mxu0 0.0
    %v1100 = vand.u32 %v39, 4294901760
    %1101 = vmatpush1.msra.mxu0 %v1100
    %1102 = vmatprep.subr.mxu0 0.0
    %v1103 = vand.u32 %v40, 4294901760
    %1104 = vmatpush1.msra.mxu0 %v1103
    %1105 = vmatprep.subr.mxu0 0.0
    %v1106 = vand.u32 %v41, 4294901760
    %1107 = vmatpush1.msra.mxu0 %v1106
    %1108 = vmatprep.subr.mxu0 0.0
    %v1109 = vand.u32 %v42, 4294901760
    %1110 = vmatpush1.msra.mxu0 %v1109
    %1111 = vmatprep.subr.mxu0 0.0
    %v1112 = vand.u32 %v43, 4294901760
    %1113 = vmatpush1.msra.mxu0 %v1112
    %v1114 = vand.u32 %v1015, 4294901760
    %v1115 = vsub.f32 %v1015, %v1114
    %v1116 = vand.u32 %v1115, 4294901760
    %v1117 = vsub.f32 %v1115, %v1116
    %v1118 = vand.u32 %v1117, 4294901760
    %1119 = vmatprep.mubr.f32.mxu0 %v1118
    %v1120 = vand.u32 %v1014, 4294901760
    %v1121 = vsub.f32 %v1014, %v1120
    %v1122 = vand.u32 %v1121, 4294901760
    %v1123 = vsub.f32 %v1121, %v1122
    %v1124 = vand.u32 %v1123, 4294901760
    %1125 = vmatmul.mubr.f32.gmra.mrb[0].mxu0 %v1124
    %v1126 = vpop.f32.mrb[0].mxu0
    %v1127 = vadd.f32 0.0, %v1126
    %v1128 = vpop.f32.mrb[0].mxu0
    %v1129 = vand.u32 %v1017, 4294901760
    %v1130 = vsub.f32 %v1017, %v1129
    %v1131 = vand.u32 %v1130, 4294901760
    %v1132 = vsub.f32 %v1130, %v1131
    %v1133 = vand.u32 %v1132, 4294901760
    %1134 = vmatprep.mubr.f32.mxu0 %v1133
    %v1135 = vand.u32 %v1016, 4294901760
    %v1136 = vsub.f32 %v1016, %v1135
    %v1137 = vand.u32 %v1136, 4294901760
    %v1138 = vsub.f32 %v1136, %v1137
    %v1139 = vand.u32 %v1138, 4294901760
    %1140 = vmatmul.mubr.f32.gmra.mrb[0].mxu0 %v1139
    %v1141 = vpop.f32.mrb[0].mxu0
    %v1142 = vadd.f32 0.0, %v1141
    %v1143 = vpop.f32.mrb[0].mxu0
    %1144 = vdwg.mxu0
    %1145 = vmatprep.subr.mxu0 0.0
    %v1146 = vand.u32 %v12, 4294901760
    %v1147 = vsub.f32 %v12, %v1146
    %v1148 = vand.u32 %v1147, 4294901760
    %v1149 = vsub.f32 %v1147, %v1148
    %v1150 = vand.u32 %v1149, 4294901760
    %1151 = vmatpush1.msra.mxu0 %v1150
    %1152 = vmatprep.subr.mxu0 0.0
    %v1153 = vand.u32 %v13, 4294901760
    %v1154 = vsub.f32 %v13, %v1153
    %v1155 = vand.u32 %v1154, 4294901760
    %v1156 = vsub.f32 %v1154, %v1155
    %v1157 = vand.u32 %v1156, 4294901760
    %1158 = vmatpush1.msra.mxu0 %v1157
    %1159 = vmatprep.subr.mxu0 0.0
    %v1160 = vand.u32 %v14, 4294901760
    %v1161 = vsub.f32 %v14, %v1160
    %v1162 = vand.u32 %v1161, 4294901760
    %v1163 = vsub.f32 %v1161, %v1162
    %v1164 = vand.u32 %v1163, 4294901760
    %1165 = vmatpush1.msra.mxu0 %v1164
    %1166 = vmatprep.subr.mxu0 0.0
    %v1167 = vand.u32 %v15, 4294901760
    %v1168 = vsub.f32 %v15, %v1167
    %v1169 = vand.u32 %v1168, 4294901760
    %v1170 = vsub.f32 %v1168, %v1169
    %v1171 = vand.u32 %v1170, 4294901760
    %1172 = vmatpush1.msra.mxu0 %v1171
    %1173 = vmatprep.subr.mxu0 0.0
    %v1174 = vand.u32 %v16, 4294901760
    %v1175 = vsub.f32 %v16, %v1174
    %v1176 = vand.u32 %v1175, 4294901760
    %v1177 = vsub.f32 %v1175, %v1176
    %v1178 = vand.u32 %v1177, 4294901760
    %1179 = vmatpush1.msra.mxu0 %v1178
    %1180 = vmatprep.subr.mxu0 0.0
    %v1181 = vand.u32 %v17, 4294901760
    %v1182 = vsub.f32 %v17, %v1181
    %v1183 = vand.u32 %v1182, 4294901760
    %v1184 = vsub.f32 %v1182, %v1183
    %v1185 = vand.u32 %v1184, 4294901760
    %1186 = vmatpush1.msra.mxu0 %v1185
    %1187 = vmatprep.subr.mxu0 0.0
    %v1188 = vand.u32 %v18, 4294901760
    %v1189 = vsub.f32 %v18, %v1188
    %v1190 = vand.u32 %v1189, 4294901760
    %v1191 = vsub.f32 %v1189, %v1190
    %v1192 = vand.u32 %v1191, 4294901760
    %1193 = vmatpush1.msra.mxu0 %v1192
    %1194 = vmatprep.subr.mxu0 0.0
    %v1195 = vand.u32 %v19, 4294901760
    %v1196 = vsub.f32 %v19, %v1195
    %v1197 = vand.u32 %v1196, 4294901760
    %v1198 = vsub.f32 %v1196, %v1197
    %v1199 = vand.u32 %v1198, 4294901760
    %1200 = vmatpush1.msra.mxu0 %v1199
    %1201 = vmatprep.subr.mxu0 0.0
    %v1202 = vand.u32 %v20, 4294901760
    %v1203 = vsub.f32 %v20, %v1202
    %v1204 = vand.u32 %v1203, 4294901760
    %v1205 = vsub.f32 %v1203, %v1204
    %v1206 = vand.u32 %v1205, 4294901760
    %1207 = vmatpush1.msra.mxu0 %v1206
    %1208 = vmatprep.subr.mxu0 0.0
    %v1209 = vand.u32 %v21, 4294901760
    %v1210 = vsub.f32 %v21, %v1209
    %v1211 = vand.u32 %v1210, 4294901760
    %v1212 = vsub.f32 %v1210, %v1211
    %v1213 = vand.u32 %v1212, 4294901760
    %1214 = vmatpush1.msra.mxu0 %v1213
    %1215 = vmatprep.subr.mxu0 0.0
    %v1216 = vand.u32 %v22, 4294901760
    %v1217 = vsub.f32 %v22, %v1216
    %v1218 = vand.u32 %v1217, 4294901760
    %v1219 = vsub.f32 %v1217, %v1218
    %v1220 = vand.u32 %v1219, 4294901760
    %1221 = vmatpush1.msra.mxu0 %v1220
    %1222 = vmatprep.subr.mxu0 0.0
    %v1223 = vand.u32 %v23, 4294901760
    %v1224 = vsub.f32 %v23, %v1223
    %v1225 = vand.u32 %v1224, 4294901760
    %v1226 = vsub.f32 %v1224, %v1225
    %v1227 = vand.u32 %v1226, 4294901760
    %1228 = vmatpush1.msra.mxu0 %v1227
    %1229 = vmatprep.subr.mxu0 0.0
    %v1230 = vand.u32 %v24, 4294901760
    %v1231 = vsub.f32 %v24, %v1230
    %v1232 = vand.u32 %v1231, 4294901760
    %v1233 = vsub.f32 %v1231, %v1232
    %v1234 = vand.u32 %v1233, 4294901760
    %1235 = vmatpush1.msra.mxu0 %v1234
    %1236 = vmatprep.subr.mxu0 0.0
    %v1237 = vand.u32 %v25, 4294901760
    %v1238 = vsub.f32 %v25, %v1237
    %v1239 = vand.u32 %v1238, 4294901760
    %v1240 = vsub.f32 %v1238, %v1239
    %v1241 = vand.u32 %v1240, 4294901760
    %1242 = vmatpush1.msra.mxu0 %v1241
    %1243 = vmatprep.subr.mxu0 0.0
    %v1244 = vand.u32 %v26, 4294901760
    %v1245 = vsub.f32 %v26, %v1244
    %v1246 = vand.u32 %v1245, 4294901760
    %v1247 = vsub.f32 %v1245, %v1246
    %v1248 = vand.u32 %v1247, 4294901760
    %1249 = vmatpush1.msra.mxu0 %v1248
    %1250 = vmatprep.subr.mxu0 0.0
    %v1251 = vand.u32 %v27, 4294901760
    %v1252 = vsub.f32 %v27, %v1251
    %v1253 = vand.u32 %v1252, 4294901760
    %v1254 = vsub.f32 %v1252, %v1253
    %v1255 = vand.u32 %v1254, 4294901760
    %1256 = vmatpush1.msra.mxu0 %v1255
    %1257 = vmatprep.subr.mxu0 0.0
    %v1258 = vand.u32 %v28, 4294901760
    %v1259 = vsub.f32 %v28, %v1258
    %v1260 = vand.u32 %v1259, 4294901760
    %v1261 = vsub.f32 %v1259, %v1260
    %v1262 = vand.u32 %v1261, 4294901760
    %1263 = vmatpush1.msra.mxu0 %v1262
    %1264 = vmatprep.subr.mxu0 0.0
    %v1265 = vand.u32 %v29, 4294901760
    %v1266 = vsub.f32 %v29, %v1265
    %v1267 = vand.u32 %v1266, 4294901760
    %v1268 = vsub.f32 %v1266, %v1267
    %v1269 = vand.u32 %v1268, 4294901760
    %1270 = vmatpush1.msra.mxu0 %v1269
    %1271 = vmatprep.subr.mxu0 0.0
    %v1272 = vand.u32 %v30, 4294901760
    %v1273 = vsub.f32 %v30, %v1272
    %v1274 = vand.u32 %v1273, 4294901760
    %v1275 = vsub.f32 %v1273, %v1274
    %v1276 = vand.u32 %v1275, 4294901760
    %1277 = vmatpush1.msra.mxu0 %v1276
    %1278 = vmatprep.subr.mxu0 0.0
    %v1279 = vand.u32 %v31, 4294901760
    %v1280 = vsub.f32 %v31, %v1279
    %v1281 = vand.u32 %v1280, 4294901760
    %v1282 = vsub.f32 %v1280, %v1281
    %v1283 = vand.u32 %v1282, 4294901760
    %1284 = vmatpush1.msra.mxu0 %v1283
    %1285 = vmatprep.subr.mxu0 0.0
    %v1286 = vand.u32 %v32, 4294901760
    %v1287 = vsub.f32 %v32, %v1286
    %v1288 = vand.u32 %v1287, 4294901760
    %v1289 = vsub.f32 %v1287, %v1288
    %v1290 = vand.u32 %v1289, 4294901760
    %1291 = vmatpush1.msra.mxu0 %v1290
    %1292 = vmatprep.subr.mxu0 0.0
    %v1293 = vand.u32 %v33, 4294901760
    %v1294 = vsub.f32 %v33, %v1293
    %v1295 = vand.u32 %v1294, 4294901760
    %v1296 = vsub.f32 %v1294, %v1295
    %v1297 = vand.u32 %v1296, 4294901760
    %1298 = vmatpush1.msra.mxu0 %v1297
    %1299 = vmatprep.subr.mxu0 0.0
    %v1300 = vand.u32 %v34, 4294901760
    %v1301 = vsub.f32 %v34, %v1300
    %v1302 = vand.u32 %v1301, 4294901760
    %v1303 = vsub.f32 %v1301, %v1302
    %v1304 = vand.u32 %v1303, 4294901760
    %1305 = vmatpush1.msra.mxu0 %v1304
    %1306 = vmatprep.subr.mxu0 0.0
    %v1307 = vand.u32 %v35, 4294901760
    %v1308 = vsub.f32 %v35, %v1307
    %v1309 = vand.u32 %v1308, 4294901760
    %v1310 = vsub.f32 %v1308, %v1309
    %v1311 = vand.u32 %v1310, 4294901760
    %1312 = vmatpush1.msra.mxu0 %v1311
    %1313 = vmatprep.subr.mxu0 0.0
    %v1314 = vand.u32 %v36, 4294901760
    %v1315 = vsub.f32 %v36, %v1314
    %v1316 = vand.u32 %v1315, 4294901760
    %v1317 = vsub.f32 %v1315, %v1316
    %v1318 = vand.u32 %v1317, 4294901760
    %1319 = vmatpush1.msra.mxu0 %v1318
    %1320 = vmatprep.subr.mxu0 0.0
    %v1321 = vand.u32 %v37, 4294901760
    %v1322 = vsub.f32 %v37, %v1321
    %v1323 = vand.u32 %v1322, 4294901760
    %v1324 = vsub.f32 %v1322, %v1323
    %v1325 = vand.u32 %v1324, 4294901760
    %1326 = vmatpush1.msra.mxu0 %v1325
    %1327 = vmatprep.subr.mxu0 0.0
    %v1328 = vand.u32 %v38, 4294901760
    %v1329 = vsub.f32 %v38, %v1328
    %v1330 = vand.u32 %v1329, 4294901760
    %v1331 = vsub.f32 %v1329, %v1330
    %v1332 = vand.u32 %v1331, 4294901760
    %1333 = vmatpush1.msra.mxu0 %v1332
    %1334 = vmatprep.subr.mxu0 0.0
    %v1335 = vand.u32 %v39, 4294901760
    %v1336 = vsub.f32 %v39, %v1335
    %v1337 = vand.u32 %v1336, 4294901760
    %v1338 = vsub.f32 %v1336, %v1337
    %v1339 = vand.u32 %v1338, 4294901760
    %1340 = vmatpush1.msra.mxu0 %v1339
    %1341 = vmatprep.subr.mxu0 0.0
    %v1342 = vand.u32 %v40, 4294901760
    %v1343 = vsub.f32 %v40, %v1342
    %v1344 = vand.u32 %v1343, 4294901760
    %v1345 = vsub.f32 %v1343, %v1344
    %v1346 = vand.u32 %v1345, 4294901760
    %1347 = vmatpush1.msra.mxu0 %v1346
    %1348 = vmatprep.subr.mxu0 0.0
    %v1349 = vand.u32 %v41, 4294901760
    %v1350 = vsub.f32 %v41, %v1349
    %v1351 = vand.u32 %v1350, 4294901760
    %v1352 = vsub.f32 %v1350, %v1351
    %v1353 = vand.u32 %v1352, 4294901760
    %1354 = vmatpush1.msra.mxu0 %v1353
    %1355 = vmatprep.subr.mxu0 0.0
    %v1356 = vand.u32 %v42, 4294901760
    %v1357 = vsub.f32 %v42, %v1356
    %v1358 = vand.u32 %v1357, 4294901760
    %v1359 = vsub.f32 %v1357, %v1358
    %v1360 = vand.u32 %v1359, 4294901760
    %1361 = vmatpush1.msra.mxu0 %v1360
    %1362 = vmatprep.subr.mxu0 0.0
    %v1363 = vand.u32 %v43, 4294901760
    %v1364 = vsub.f32 %v43, %v1363
    %v1365 = vand.u32 %v1364, 4294901760
    %v1366 = vsub.f32 %v1364, %v1365
    %v1367 = vand.u32 %v1366, 4294901760
    %1368 = vmatpush1.msra.mxu0 %v1367
    %v1369 = vand.u32 %v1015, 4294901760
    %1370 = vmatprep.mubr.f32.mxu0 %v1369
    %v1371 = vand.u32 %v1014, 4294901760
    %1372 = vmatmul.mubr.f32.gmra.mrb[0].mxu0 %v1371
    %v1373 = vpop.f32.mrb[0].mxu0
    %v1374 = vadd.f32 %v1127, %v1373
    %v1375 = vpop.f32.mrb[0].mxu0
    %v1376 = vand.u32 %v1017, 4294901760
    %1377 = vmatprep.mubr.f32.mxu0 %v1376
    %v1378 = vand.u32 %v1016, 4294901760
    %1379 = vmatmul.mubr.f32.gmra.mrb[0].mxu0 %v1378
    %v1380 = vpop.f32.mrb[0].mxu0
    %v1381 = vadd.f32 %v1142, %v1380
    %v1382 = vpop.f32.mrb[0].mxu0
    %1383 = vdwg.mxu0
    %1384 = vmatprep.subr.mxu0 0.0
    %v1385 = vand.u32 %v12, 4294901760
    %v1386 = vsub.f32 %v12, %v1385
    %1387 = vmatpush1.msra.mxu0 %v1386
    %1388 = vmatprep.subr.mxu0 0.0
    %v1389 = vand.u32 %v13, 4294901760
    %v1390 = vsub.f32 %v13, %v1389
    %1391 = vmatpush1.msra.mxu0 %v1390
    %1392 = vmatprep.subr.mxu0 0.0
    %v1393 = vand.u32 %v14, 4294901760
    %v1394 = vsub.f32 %v14, %v1393
    %1395 = vmatpush1.msra.mxu0 %v1394
    %1396 = vmatprep.subr.mxu0 0.0
    %v1397 = vand.u32 %v15, 4294901760
    %v1398 = vsub.f32 %v15, %v1397
    %1399 = vmatpush1.msra.mxu0 %v1398
    %1400 = vmatprep.subr.mxu0 0.0
    %v1401 = vand.u32 %v16, 4294901760
    %v1402 = vsub.f32 %v16, %v1401
    %1403 = vmatpush1.msra.mxu0 %v1402
    %1404 = vmatprep.subr.mxu0 0.0
    %v1405 = vand.u32 %v17, 4294901760
    %v1406 = vsub.f32 %v17, %v1405
    %1407 = vmatpush1.msra.mxu0 %v1406
    %1408 = vmatprep.subr.mxu0 0.0
    %v1409 = vand.u32 %v18, 4294901760
    %v1410 = vsub.f32 %v18, %v1409
    %1411 = vmatpush1.msra.mxu0 %v1410
    %1412 = vmatprep.subr.mxu0 0.0
    %v1413 = vand.u32 %v19, 4294901760
    %v1414 = vsub.f32 %v19, %v1413
    %1415 = vmatpush1.msra.mxu0 %v1414
    %1416 = vmatprep.subr.mxu0 0.0
    %v1417 = vand.u32 %v20, 4294901760
    %v1418 = vsub.f32 %v20, %v1417
    %1419 = vmatpush1.msra.mxu0 %v1418
    %1420 = vmatprep.subr.mxu0 0.0
    %v1421 = vand.u32 %v21, 4294901760
    %v1422 = vsub.f32 %v21, %v1421
    %1423 = vmatpush1.msra.mxu0 %v1422
    %1424 = vmatprep.subr.mxu0 0.0
    %v1425 = vand.u32 %v22, 4294901760
    %v1426 = vsub.f32 %v22, %v1425
    %1427 = vmatpush1.msra.mxu0 %v1426
    %1428 = vmatprep.subr.mxu0 0.0
    %v1429 = vand.u32 %v23, 4294901760
    %v1430 = vsub.f32 %v23, %v1429
    %1431 = vmatpush1.msra.mxu0 %v1430
    %1432 = vmatprep.subr.mxu0 0.0
    %v1433 = vand.u32 %v24, 4294901760
    %v1434 = vsub.f32 %v24, %v1433
    %1435 = vmatpush1.msra.mxu0 %v1434
    %1436 = vmatprep.subr.mxu0 0.0
    %v1437 = vand.u32 %v25, 4294901760
    %v1438 = vsub.f32 %v25, %v1437
    %1439 = vmatpush1.msra.mxu0 %v1438
    %1440 = vmatprep.subr.mxu0 0.0
    %v1441 = vand.u32 %v26, 4294901760
    %v1442 = vsub.f32 %v26, %v1441
    %1443 = vmatpush1.msra.mxu0 %v1442
    %1444 = vmatprep.subr.mxu0 0.0
    %v1445 = vand.u32 %v27, 4294901760
    %v1446 = vsub.f32 %v27, %v1445
    %1447 = vmatpush1.msra.mxu0 %v1446
    %1448 = vmatprep.subr.mxu0 0.0
    %v1449 = vand.u32 %v28, 4294901760
    %v1450 = vsub.f32 %v28, %v1449
    %1451 = vmatpush1.msra.mxu0 %v1450
    %1452 = vmatprep.subr.mxu0 0.0
    %v1453 = vand.u32 %v29, 4294901760
    %v1454 = vsub.f32 %v29, %v1453
    %1455 = vmatpush1.msra.mxu0 %v1454
    %1456 = vmatprep.subr.mxu0 0.0
    %v1457 = vand.u32 %v30, 4294901760
    %v1458 = vsub.f32 %v30, %v1457
    %1459 = vmatpush1.msra.mxu0 %v1458
    %1460 = vmatprep.subr.mxu0 0.0
    %v1461 = vand.u32 %v31, 4294901760
    %v1462 = vsub.f32 %v31, %v1461
    %1463 = vmatpush1.msra.mxu0 %v1462
    %1464 = vmatprep.subr.mxu0 0.0
    %v1465 = vand.u32 %v32, 4294901760
    %v1466 = vsub.f32 %v32, %v1465
    %1467 = vmatpush1.msra.mxu0 %v1466
    %1468 = vmatprep.subr.mxu0 0.0
    %v1469 = vand.u32 %v33, 4294901760
    %v1470 = vsub.f32 %v33, %v1469
    %1471 = vmatpush1.msra.mxu0 %v1470
    %1472 = vmatprep.subr.mxu0 0.0
    %v1473 = vand.u32 %v34, 4294901760
    %v1474 = vsub.f32 %v34, %v1473
    %1475 = vmatpush1.msra.mxu0 %v1474
    %1476 = vmatprep.subr.mxu0 0.0
    %v1477 = vand.u32 %v35, 4294901760
    %v1478 = vsub.f32 %v35, %v1477
    %1479 = vmatpush1.msra.mxu0 %v1478
    %1480 = vmatprep.subr.mxu0 0.0
    %v1481 = vand.u32 %v36, 4294901760
    %v1482 = vsub.f32 %v36, %v1481
    %1483 = vmatpush1.msra.mxu0 %v1482
    %1484 = vmatprep.subr.mxu0 0.0
    %v1485 = vand.u32 %v37, 4294901760
    %v1486 = vsub.f32 %v37, %v1485
    %1487 = vmatpush1.msra.mxu0 %v1486
    %1488 = vmatprep.subr.mxu0 0.0
    %v1489 = vand.u32 %v38, 4294901760
    %v1490 = vsub.f32 %v38, %v1489
    %1491 = vmatpush1.msra.mxu0 %v1490
    %1492 = vmatprep.subr.mxu0 0.0
    %v1493 = vand.u32 %v39, 4294901760
    %v1494 = vsub.f32 %v39, %v1493
    %1495 = vmatpush1.msra.mxu0 %v1494
    %1496 = vmatprep.subr.mxu0 0.0
    %v1497 = vand.u32 %v40, 4294901760
    %v1498 = vsub.f32 %v40, %v1497
    %1499 = vmatpush1.msra.mxu0 %v1498
    %1500 = vmatprep.subr.mxu0 0.0
    %v1501 = vand.u32 %v41, 4294901760
    %v1502 = vsub.f32 %v41, %v1501
    %1503 = vmatpush1.msra.mxu0 %v1502
    %1504 = vmatprep.subr.mxu0 0.0
    %v1505 = vand.u32 %v42, 4294901760
    %v1506 = vsub.f32 %v42, %v1505
    %1507 = vmatpush1.msra.mxu0 %v1506
    %1508 = vmatprep.subr.mxu0 0.0
    %v1509 = vand.u32 %v43, 4294901760
    %v1510 = vsub.f32 %v43, %v1509
    %1511 = vmatpush1.msra.mxu0 %v1510
    %v1512 = vand.u32 %v1015, 4294901760
    %v1513 = vsub.f32 %v1015, %v1512
    %1514 = vmatprep.mubr.f32.mxu0 %v1513
    %v1515 = vand.u32 %v1014, 4294901760
    %v1516 = vsub.f32 %v1014, %v1515
    %1517 = vmatmul.mubr.f32.gmra.mrb[0].mxu0 %v1516
    %v1518 = vpop.f32.mrb[0].mxu0
    %v1519 = vadd.f32 %v1374, %v1518
    %v1520 = vpop.f32.mrb[0].mxu0
    %v1521 = vand.u32 %v1017, 4294901760
    %v1522 = vsub.f32 %v1017, %v1521
    %1523 = vmatprep.mubr.f32.mxu0 %v1522
    %v1524 = vand.u32 %v1016, 4294901760
    %v1525 = vsub.f32 %v1016, %v1524
    %1526 = vmatmul.mubr.f32.gmra.mrb[0].mxu0 %v1525
    %v1527 = vpop.f32.mrb[0].mxu0
    %v1528 = vadd.f32 %v1381, %v1527
    %v1529 = vpop.f32.mrb[0].mxu0
    %1530 = vdwg.mxu0
    %1531 = vmatprep.subr.mxu0 0.0
    %v1532 = vand.u32 %v12, 4294901760
    %1533 = vmatpush1.msra.mxu0 %v1532
    %1534 = vmatprep.subr.mxu0 0.0
    %v1535 = vand.u32 %v13, 4294901760
    %1536 = vmatpush1.msra.mxu0 %v1535
    %1537 = vmatprep.subr.mxu0 0.0
    %v1538 = vand.u32 %v14, 4294901760
    %1539 = vmatpush1.msra.mxu0 %v1538
    %1540 = vmatprep.subr.mxu0 0.0
    %v1541 = vand.u32 %v15, 4294901760
    %1542 = vmatpush1.msra.mxu0 %v1541
    %1543 = vmatprep.subr.mxu0 0.0
    %v1544 = vand.u32 %v16, 4294901760
    %1545 = vmatpush1.msra.mxu0 %v1544
    %1546 = vmatprep.subr.mxu0 0.0
    %v1547 = vand.u32 %v17, 4294901760
    %1548 = vmatpush1.msra.mxu0 %v1547
    %1549 = vmatprep.subr.mxu0 0.0
    %v1550 = vand.u32 %v18, 4294901760
    %1551 = vmatpush1.msra.mxu0 %v1550
    %1552 = vmatprep.subr.mxu0 0.0
    %v1553 = vand.u32 %v19, 4294901760
    %1554 = vmatpush1.msra.mxu0 %v1553
    %1555 = vmatprep.subr.mxu0 0.0
    %v1556 = vand.u32 %v20, 4294901760
    %1557 = vmatpush1.msra.mxu0 %v1556
    %1558 = vmatprep.subr.mxu0 0.0
    %v1559 = vand.u32 %v21, 4294901760
    %1560 = vmatpush1.msra.mxu0 %v1559
    %1561 = vmatprep.subr.mxu0 0.0
    %v1562 = vand.u32 %v22, 4294901760
    %1563 = vmatpush1.msra.mxu0 %v1562
    %1564 = vmatprep.subr.mxu0 0.0
    %v1565 = vand.u32 %v23, 4294901760
    %1566 = vmatpush1.msra.mxu0 %v1565
    %1567 = vmatprep.subr.mxu0 0.0
    %v1568 = vand.u32 %v24, 4294901760
    %1569 = vmatpush1.msra.mxu0 %v1568
    %1570 = vmatprep.subr.mxu0 0.0
    %v1571 = vand.u32 %v25, 4294901760
    %1572 = vmatpush1.msra.mxu0 %v1571
    %1573 = vmatprep.subr.mxu0 0.0
    %v1574 = vand.u32 %v26, 4294901760
    %1575 = vmatpush1.msra.mxu0 %v1574
    %1576 = vmatprep.subr.mxu0 0.0
    %v1577 = vand.u32 %v27, 4294901760
    %1578 = vmatpush1.msra.mxu0 %v1577
    %1579 = vmatprep.subr.mxu0 0.0
    %v1580 = vand.u32 %v28, 4294901760
    %1581 = vmatpush1.msra.mxu0 %v1580
    %1582 = vmatprep.subr.mxu0 0.0
    %v1583 = vand.u32 %v29, 4294901760
    %1584 = vmatpush1.msra.mxu0 %v1583
    %1585 = vmatprep.subr.mxu0 0.0
    %v1586 = vand.u32 %v30, 4294901760
    %1587 = vmatpush1.msra.mxu0 %v1586
    %1588 = vmatprep.subr.mxu0 0.0
    %v1589 = vand.u32 %v31, 4294901760
    %1590 = vmatpush1.msra.mxu0 %v1589
    %1591 = vmatprep.subr.mxu0 0.0
    %v1592 = vand.u32 %v32, 4294901760
    %1593 = vmatpush1.msra.mxu0 %v1592
    %1594 = vmatprep.subr.mxu0 0.0
    %v1595 = vand.u32 %v33, 4294901760
    %1596 = vmatpush1.msra.mxu0 %v1595
    %1597 = vmatprep.subr.mxu0 0.0
    %v1598 = vand.u32 %v34, 4294901760
    %1599 = vmatpush1.msra.mxu0 %v1598
    %1600 = vmatprep.subr.mxu0 0.0
    %v1601 = vand.u32 %v35, 4294901760
    %1602 = vmatpush1.msra.mxu0 %v1601
    %1603 = vmatprep.subr.mxu0 0.0
    %v1604 = vand.u32 %v36, 4294901760
    %1605 = vmatpush1.msra.mxu0 %v1604
    %1606 = vmatprep.subr.mxu0 0.0
    %v1607 = vand.u32 %v37, 4294901760
    %1608 = vmatpush1.msra.mxu0 %v1607
    %1609 = vmatprep.subr.mxu0 0.0
    %v1610 = vand.u32 %v38, 4294901760
    %1611 = vmatpush1.msra.mxu0 %v1610
    %1612 = vmatprep.subr.mxu0 0.0
    %v1613 = vand.u32 %v39, 4294901760
    %1614 = vmatpush1.msra.mxu0 %v1613
    %1615 = vmatprep.subr.mxu0 0.0
    %v1616 = vand.u32 %v40, 4294901760
    %1617 = vmatpush1.msra.mxu0 %v1616
    %1618 = vmatprep.subr.mxu0 0.0
    %v1619 = vand.u32 %v41, 4294901760
    %1620 = vmatpush1.msra.mxu0 %v1619
    %1621 = vmatprep.subr.mxu0 0.0
    %v1622 = vand.u32 %v42, 4294901760
    %1623 = vmatpush1.msra.mxu0 %v1622
    %1624 = vmatprep.subr.mxu0 0.0
    %v1625 = vand.u32 %v43, 4294901760
    %1626 = vmatpush1.msra.mxu0 %v1625
    %v1627 = vand.u32 %v1015, 4294901760
    %v1628 = vsub.f32 %v1015, %v1627
    %v1629 = vand.u32 %v1628, 4294901760
    %1630 = vmatprep.mubr.f32.mxu0 %v1629
    %v1631 = vand.u32 %v1014, 4294901760
    %v1632 = vsub.f32 %v1014, %v1631
    %v1633 = vand.u32 %v1632, 4294901760
    %1634 = vmatmul.mubr.f32.gmra.mrb[0].mxu0 %v1633
    %v1635 = vpop.f32.mrb[0].mxu0
    %v1636 = vadd.f32 %v1519, %v1635
    %v1637 = vpop.f32.mrb[0].mxu0
    %v1638 = vand.u32 %v1017, 4294901760
    %v1639 = vsub.f32 %v1017, %v1638
    %v1640 = vand.u32 %v1639, 4294901760
    %1641 = vmatprep.mubr.f32.mxu0 %v1640
    %v1642 = vand.u32 %v1016, 4294901760
    %v1643 = vsub.f32 %v1016, %v1642
    %v1644 = vand.u32 %v1643, 4294901760
    %1645 = vmatmul.mubr.f32.gmra.mrb[0].mxu0 %v1644
    %v1646 = vpop.f32.mrb[0].mxu0
    %v1647 = vadd.f32 %v1528, %v1646
    %v1648 = vpop.f32.mrb[0].mxu0
    %1649 = vdwg.mxu0
    %1650 = vmatprep.subr.mxu0 0.0
    %v1651 = vand.u32 %v12, 4294901760
    %v1652 = vsub.f32 %v12, %v1651
    %v1653 = vand.u32 %v1652, 4294901760
    %1654 = vmatpush1.msra.mxu0 %v1653
    %1655 = vmatprep.subr.mxu0 0.0
    %v1656 = vand.u32 %v13, 4294901760
    %v1657 = vsub.f32 %v13, %v1656
    %v1658 = vand.u32 %v1657, 4294901760
    %1659 = vmatpush1.msra.mxu0 %v1658
    %1660 = vmatprep.subr.mxu0 0.0
    %v1661 = vand.u32 %v14, 4294901760
    %v1662 = vsub.f32 %v14, %v1661
    %v1663 = vand.u32 %v1662, 4294901760
    %1664 = vmatpush1.msra.mxu0 %v1663
    %1665 = vmatprep.subr.mxu0 0.0
    %v1666 = vand.u32 %v15, 4294901760
    %v1667 = vsub.f32 %v15, %v1666
    %v1668 = vand.u32 %v1667, 4294901760
    %1669 = vmatpush1.msra.mxu0 %v1668
    %1670 = vmatprep.subr.mxu0 0.0
    %v1671 = vand.u32 %v16, 4294901760
    %v1672 = vsub.f32 %v16, %v1671
    %v1673 = vand.u32 %v1672, 4294901760
    %1674 = vmatpush1.msra.mxu0 %v1673
    %1675 = vmatprep.subr.mxu0 0.0
    %v1676 = vand.u32 %v17, 4294901760
    %v1677 = vsub.f32 %v17, %v1676
    %v1678 = vand.u32 %v1677, 4294901760
    %1679 = vmatpush1.msra.mxu0 %v1678
    %1680 = vmatprep.subr.mxu0 0.0
    %v1681 = vand.u32 %v18, 4294901760
    %v1682 = vsub.f32 %v18, %v1681
    %v1683 = vand.u32 %v1682, 4294901760
    %1684 = vmatpush1.msra.mxu0 %v1683
    %1685 = vmatprep.subr.mxu0 0.0
    %v1686 = vand.u32 %v19, 4294901760
    %v1687 = vsub.f32 %v19, %v1686
    %v1688 = vand.u32 %v1687, 4294901760
    %1689 = vmatpush1.msra.mxu0 %v1688
    %1690 = vmatprep.subr.mxu0 0.0
    %v1691 = vand.u32 %v20, 4294901760
    %v1692 = vsub.f32 %v20, %v1691
    %v1693 = vand.u32 %v1692, 4294901760
    %1694 = vmatpush1.msra.mxu0 %v1693
    %1695 = vmatprep.subr.mxu0 0.0
    %v1696 = vand.u32 %v21, 4294901760
    %v1697 = vsub.f32 %v21, %v1696
    %v1698 = vand.u32 %v1697, 4294901760
    %1699 = vmatpush1.msra.mxu0 %v1698
    %1700 = vmatprep.subr.mxu0 0.0
    %v1701 = vand.u32 %v22, 4294901760
    %v1702 = vsub.f32 %v22, %v1701
    %v1703 = vand.u32 %v1702, 4294901760
    %1704 = vmatpush1.msra.mxu0 %v1703
    %1705 = vmatprep.subr.mxu0 0.0
    %v1706 = vand.u32 %v23, 4294901760
    %v1707 = vsub.f32 %v23, %v1706
    %v1708 = vand.u32 %v1707, 4294901760
    %1709 = vmatpush1.msra.mxu0 %v1708
    %1710 = vmatprep.subr.mxu0 0.0
    %v1711 = vand.u32 %v24, 4294901760
    %v1712 = vsub.f32 %v24, %v1711
    %v1713 = vand.u32 %v1712, 4294901760
    %1714 = vmatpush1.msra.mxu0 %v1713
    %1715 = vmatprep.subr.mxu0 0.0
    %v1716 = vand.u32 %v25, 4294901760
    %v1717 = vsub.f32 %v25, %v1716
    %v1718 = vand.u32 %v1717, 4294901760
    %1719 = vmatpush1.msra.mxu0 %v1718
    %1720 = vmatprep.subr.mxu0 0.0
    %v1721 = vand.u32 %v26, 4294901760
    %v1722 = vsub.f32 %v26, %v1721
    %v1723 = vand.u32 %v1722, 4294901760
    %1724 = vmatpush1.msra.mxu0 %v1723
    %1725 = vmatprep.subr.mxu0 0.0
    %v1726 = vand.u32 %v27, 4294901760
    %v1727 = vsub.f32 %v27, %v1726
    %v1728 = vand.u32 %v1727, 4294901760
    %1729 = vmatpush1.msra.mxu0 %v1728
    %1730 = vmatprep.subr.mxu0 0.0
    %v1731 = vand.u32 %v28, 4294901760
    %v1732 = vsub.f32 %v28, %v1731
    %v1733 = vand.u32 %v1732, 4294901760
    %1734 = vmatpush1.msra.mxu0 %v1733
    %1735 = vmatprep.subr.mxu0 0.0
    %v1736 = vand.u32 %v29, 4294901760
    %v1737 = vsub.f32 %v29, %v1736
    %v1738 = vand.u32 %v1737, 4294901760
    %1739 = vmatpush1.msra.mxu0 %v1738
    %1740 = vmatprep.subr.mxu0 0.0
    %v1741 = vand.u32 %v30, 4294901760
    %v1742 = vsub.f32 %v30, %v1741
    %v1743 = vand.u32 %v1742, 4294901760
    %1744 = vmatpush1.msra.mxu0 %v1743
    %1745 = vmatprep.subr.mxu0 0.0
    %v1746 = vand.u32 %v31, 4294901760
    %v1747 = vsub.f32 %v31, %v1746
    %v1748 = vand.u32 %v1747, 4294901760
    %1749 = vmatpush1.msra.mxu0 %v1748
    %1750 = vmatprep.subr.mxu0 0.0
    %v1751 = vand.u32 %v32, 4294901760
    %v1752 = vsub.f32 %v32, %v1751
    %v1753 = vand.u32 %v1752, 4294901760
    %1754 = vmatpush1.msra.mxu0 %v1753
    %1755 = vmatprep.subr.mxu0 0.0
    %v1756 = vand.u32 %v33, 4294901760
    %v1757 = vsub.f32 %v33, %v1756
    %v1758 = vand.u32 %v1757, 4294901760
    %1759 = vmatpush1.msra.mxu0 %v1758
    %1760 = vmatprep.subr.mxu0 0.0
    %v1761 = vand.u32 %v34, 4294901760
    %v1762 = vsub.f32 %v34, %v1761
    %v1763 = vand.u32 %v1762, 4294901760
    %1764 = vmatpush1.msra.mxu0 %v1763
    %1765 = vmatprep.subr.mxu0 0.0
    %v1766 = vand.u32 %v35, 4294901760
    %v1767 = vsub.f32 %v35, %v1766
    %v1768 = vand.u32 %v1767, 4294901760
    %1769 = vmatpush1.msra.mxu0 %v1768
    %1770 = vmatprep.subr.mxu0 0.0
    %v1771 = vand.u32 %v36, 4294901760
    %v1772 = vsub.f32 %v36, %v1771
    %v1773 = vand.u32 %v1772, 4294901760
    %1774 = vmatpush1.msra.mxu0 %v1773
    %1775 = vmatprep.subr.mxu0 0.0
    %v1776 = vand.u32 %v37, 4294901760
    %v1777 = vsub.f32 %v37, %v1776
    %v1778 = vand.u32 %v1777, 4294901760
    %1779 = vmatpush1.msra.mxu0 %v1778
    %1780 = vmatprep.subr.mxu0 0.0
    %v1781 = vand.u32 %v38, 4294901760
    %v1782 = vsub.f32 %v38, %v1781
    %v1783 = vand.u32 %v1782, 4294901760
    %1784 = vmatpush1.msra.mxu0 %v1783
    %1785 = vmatprep.subr.mxu0 0.0
    %v1786 = vand.u32 %v39, 4294901760
    %v1787 = vsub.f32 %v39, %v1786
    %v1788 = vand.u32 %v1787, 4294901760
    %1789 = vmatpush1.msra.mxu0 %v1788
    %1790 = vmatprep.subr.mxu0 0.0
    %v1791 = vand.u32 %v40, 4294901760
    %v1792 = vsub.f32 %v40, %v1791
    %v1793 = vand.u32 %v1792, 4294901760
    %1794 = vmatpush1.msra.mxu0 %v1793
    %1795 = vmatprep.subr.mxu0 0.0
    %v1796 = vand.u32 %v41, 4294901760
    %v1797 = vsub.f32 %v41, %v1796
    %v1798 = vand.u32 %v1797, 4294901760
    %1799 = vmatpush1.msra.mxu0 %v1798
    %1800 = vmatprep.subr.mxu0 0.0
    %v1801 = vand.u32 %v42, 4294901760
    %v1802 = vsub.f32 %v42, %v1801
    %v1803 = vand.u32 %v1802, 4294901760
    %1804 = vmatpush1.msra.mxu0 %v1803
    %1805 = vmatprep.subr.mxu0 0.0
    %v1806 = vand.u32 %v43, 4294901760
    %v1807 = vsub.f32 %v43, %v1806
    %v1808 = vand.u32 %v1807, 4294901760
    %1809 = vmatpush1.msra.mxu0 %v1808
    %v1810 = vand.u32 %v1015, 4294901760
    %1811 = vmatprep.mubr.f32.mxu0 %v1810
    %v1812 = vand.u32 %v1014, 4294901760
    %1813 = vmatmul.mubr.f32.gmra.mrb[0].mxu0 %v1812
    %v1814 = vpop.f32.mrb[0].mxu0
    %v1815 = vadd.f32 %v1636, %v1814
    %v1816 = vpop.f32.mrb[0].mxu0
    %v1817 = vand.u32 %v1017, 4294901760
    %1818 = vmatprep.mubr.f32.mxu0 %v1817
    %v1819 = vand.u32 %v1016, 4294901760
    %1820 = vmatmul.mubr.f32.gmra.mrb[0].mxu0 %v1819
    %v1821 = vpop.f32.mrb[0].mxu0
    %v1822 = vadd.f32 %v1647, %v1821
    %v1823 = vpop.f32.mrb[0].mxu0
    %1824 = vdwg.mxu0
    %1825 = vmatprep.subr.mxu0 0.0
    %v1826 = vand.u32 %v12, 4294901760
    %1827 = vmatpush1.msra.mxu0 %v1826
    %1828 = vmatprep.subr.mxu0 0.0
    %v1829 = vand.u32 %v13, 4294901760
    %1830 = vmatpush1.msra.mxu0 %v1829
    %1831 = vmatprep.subr.mxu0 0.0
    %v1832 = vand.u32 %v14, 4294901760
    %1833 = vmatpush1.msra.mxu0 %v1832
    %1834 = vmatprep.subr.mxu0 0.0
    %v1835 = vand.u32 %v15, 4294901760
    %1836 = vmatpush1.msra.mxu0 %v1835
    %1837 = vmatprep.subr.mxu0 0.0
    %v1838 = vand.u32 %v16, 4294901760
    %1839 = vmatpush1.msra.mxu0 %v1838
    %1840 = vmatprep.subr.mxu0 0.0
    %v1841 = vand.u32 %v17, 4294901760
    %1842 = vmatpush1.msra.mxu0 %v1841
    %1843 = vmatprep.subr.mxu0 0.0
    %v1844 = vand.u32 %v18, 4294901760
    %1845 = vmatpush1.msra.mxu0 %v1844
    %1846 = vmatprep.subr.mxu0 0.0
    %v1847 = vand.u32 %v19, 4294901760
    %1848 = vmatpush1.msra.mxu0 %v1847
    %1849 = vmatprep.subr.mxu0 0.0
    %v1850 = vand.u32 %v20, 4294901760
    %1851 = vmatpush1.msra.mxu0 %v1850
    %1852 = vmatprep.subr.mxu0 0.0
    %v1853 = vand.u32 %v21, 4294901760
    %1854 = vmatpush1.msra.mxu0 %v1853
    %1855 = vmatprep.subr.mxu0 0.0
    %v1856 = vand.u32 %v22, 4294901760
    %1857 = vmatpush1.msra.mxu0 %v1856
    %1858 = vmatprep.subr.mxu0 0.0
    %v1859 = vand.u32 %v23, 4294901760
    %1860 = vmatpush1.msra.mxu0 %v1859
    %1861 = vmatprep.subr.mxu0 0.0
    %v1862 = vand.u32 %v24, 4294901760
    %1863 = vmatpush1.msra.mxu0 %v1862
    %1864 = vmatprep.subr.mxu0 0.0
    %v1865 = vand.u32 %v25, 4294901760
    %1866 = vmatpush1.msra.mxu0 %v1865
    %1867 = vmatprep.subr.mxu0 0.0
    %v1868 = vand.u32 %v26, 4294901760
    %1869 = vmatpush1.msra.mxu0 %v1868
    %1870 = vmatprep.subr.mxu0 0.0
    %v1871 = vand.u32 %v27, 4294901760
    %1872 = vmatpush1.msra.mxu0 %v1871
    %1873 = vmatprep.subr.mxu0 0.0
    %v1874 = vand.u32 %v28, 4294901760
    %1875 = vmatpush1.msra.mxu0 %v1874
    %1876 = vmatprep.subr.mxu0 0.0
    %v1877 = vand.u32 %v29, 4294901760
    %1878 = vmatpush1.msra.mxu0 %v1877
    %1879 = vmatprep.subr.mxu0 0.0
    %v1880 = vand.u32 %v30, 4294901760
    %1881 = vmatpush1.msra.mxu0 %v1880
    %1882 = vmatprep.subr.mxu0 0.0
    %v1883 = vand.u32 %v31, 4294901760
    %1884 = vmatpush1.msra.mxu0 %v1883
    %1885 = vmatprep.subr.mxu0 0.0
    %v1886 = vand.u32 %v32, 4294901760
    %1887 = vmatpush1.msra.mxu0 %v1886
    %1888 = vmatprep.subr.mxu0 0.0
    %v1889 = vand.u32 %v33, 4294901760
    %1890 = vmatpush1.msra.mxu0 %v1889
    %1891 = vmatprep.subr.mxu0 0.0
    %v1892 = vand.u32 %v34, 4294901760
    %1893 = vmatpush1.msra.mxu0 %v1892
    %1894 = vmatprep.subr.mxu0 0.0
    %v1895 = vand.u32 %v35, 4294901760
    %1896 = vmatpush1.msra.mxu0 %v1895
    %1897 = vmatprep.subr.mxu0 0.0
    %v1898 = vand.u32 %v36, 4294901760
    %1899 = vmatpush1.msra.mxu0 %v1898
    %1900 = vmatprep.subr.mxu0 0.0
    %v1901 = vand.u32 %v37, 4294901760
    %1902 = vmatpush1.msra.mxu0 %v1901
    %1903 = vmatprep.subr.mxu0 0.0
    %v1904 = vand.u32 %v38, 4294901760
    %1905 = vmatpush1.msra.mxu0 %v1904
    %1906 = vmatprep.subr.mxu0 0.0
    %v1907 = vand.u32 %v39, 4294901760
    %1908 = vmatpush1.msra.mxu0 %v1907
    %1909 = vmatprep.subr.mxu0 0.0
    %v1910 = vand.u32 %v40, 4294901760
    %1911 = vmatpush1.msra.mxu0 %v1910
    %1912 = vmatprep.subr.mxu0 0.0
    %v1913 = vand.u32 %v41, 4294901760
    %1914 = vmatpush1.msra.mxu0 %v1913
    %1915 = vmatprep.subr.mxu0 0.0
    %v1916 = vand.u32 %v42, 4294901760
    %1917 = vmatpush1.msra.mxu0 %v1916
    %1918 = vmatprep.subr.mxu0 0.0
    %v1919 = vand.u32 %v43, 4294901760
    %1920 = vmatpush1.msra.mxu0 %v1919
    %v1921 = vand.u32 %v1015, 4294901760
    %1922 = vmatprep.mubr.f32.mxu0 %v1921
    %v1923 = vand.u32 %v1014, 4294901760
    %1924 = vmatmul.mubr.f32.gmra.mrb[0].mxu0 %v1923
    %v1925 = vpop.f32.mrb[0].mxu0
    %v1926 = vadd.f32 %v1815, %v1925
    %v1927 = vpop.f32.mrb[0].mxu0
    %v1928 = vand.u32 %v1017, 4294901760
    %1929 = vmatprep.mubr.f32.mxu0 %v1928
    %v1930 = vand.u32 %v1016, 4294901760
    %1931 = vmatmul.mubr.f32.gmra.mrb[0].mxu0 %v1930
    %v1932 = vpop.f32.mrb[0].mxu0
    %v1933 = vadd.f32 %v1822, %v1932
    %v1934 = vpop.f32.mrb[0].mxu0
    %1935 = vdwg.mxu0
    %1936 = vst.msk [vmem:[#allocation2] sm:$0xff] %vm83, %v1926
    %1937 = vst.msk [vmem:[#allocation2 + $0x8] sm:$0xff] %vm83, %v1933
    // Predicated region
    $region10: #{tpu_custom_call.1} parent=1 // pred_check
      _
    $region11: #{tpu_custom_call.1} parent=1 // pred_check_branch
      %1939 = sbr.rel (0) target = $region13
    $region12: #{tpu_custom_call.1} parent=1 // pred_region
      %s1941 = ssub.s32 256, 256
      %1942 = vsyncadd [#allocation3], %s1941
      %s1943 = sshll.u32 [#allocation2], 4
      %s1944 = int_to_ptr.vmem [resolvable:$true] %s1943
      %1949 = dma.vmem_to_hbm [thread:$0]  %s1944, 256, %s2, [#allocation3], 128, 128, 8
    $region13: #{tpu_custom_call.1} parent=1 // pred_fallthru
      _
    // Predicated region
    $region14: #{tpu_custom_call.1} parent=1 // pred_check
      _
    $region15: #{tpu_custom_call.1} parent=1 // pred_check_branch
      %1951 = sbr.rel (0) target = $region17
    $region16: #{tpu_custom_call.1} parent=1 // pred_region
      %1952 = dma.done [#allocation3], 256
    $region17: #{tpu_custom_call.1} parent=1 // pred_fallthru
      _
    %1953 = vsyncpa [#allocation3], 1

</llo_original>
